<compile_context>
chip_gen: v6e
topology: v6e:2x2x1
jax: 0.10.0
libtpu: 0.0.40
codegen_flags: <defaults>
</compile_context>

<pallas_src>
import functools

import jax
import jax.numpy as jnp
from jax import lax
from jax.experimental import pallas as pl
from jax.experimental.pallas import tpu as pltpu

LN_EPS = 1e-5                 # PyTorch nn.LayerNorm default
LANE = 128                    # TPU lane width
NEG_BIG = -1e30               # finite mask value (NaN-safe vs -inf)
VMEM_LIMIT = 32 * 1024 * 1024 # explicit scoped-VMEM budget (fits v5e/v6e/v7x)


def _round_up(n, m):
    return ((n + m - 1) // m) * m


# ------------------------------ Pallas kernels -------------------------------
def gpt_blocks_kernel(x_ref, ln1g_ref, ln1b_ref, wqkv_ref, wp_ref, bp_ref,
                      ln2g_ref, ln2b_ref, w1_ref, b1_ref, w2_ref, b2_ref,
                      lnfg_ref, lnfb_ref, out_ref, resid_ref,
                      *, batch, n_head, head_size, c_real):
    """All transformer Blocks fused: grid axis 0 = layer (sequential).

    Residual (BT, Cp) lives in `resid_ref` (VMEM scratch) across layers; per-layer
    weights stream via BlockSpec.  On the last layer ln_f is applied and the
    normalized activations are stored (bf16) for the lm_head kernel.
    Dropout = 0.0 -> identity.
    """
    layer = pl.program_id(0)

    @pl.when(layer == 0)
    def _():
        resid_ref[...] = x_ref[...]

    x = resid_ref[...]                              # (BT, Cp) f32, padded lanes are 0
    BT, Cp = x.shape
    T = BT // batch
    hs, C = head_size, c_real
    inv_c = 1.0 / C

    # masked LayerNorm over the real C channels (padded lanes are zero)
    lane = lax.broadcasted_iota(jnp.int32, (1, Cp), 1)
    cmask = lane < C

    def layer_norm(v, g, b):
        mean = jnp.sum(v, axis=-1, keepdims=True) * inv_c
        diff = jnp.where(cmask, v - mean, 0.0)
        var = jnp.sum(diff * diff, axis=-1, keepdims=True) * inv_c
        return diff * lax.rsqrt(var + LN_EPS) * g + b

    # --- multi-head attention: fused QKV projection (scale folded into Q cols) ---
    h = layer_norm(x, ln1g_ref[0], ln1b_ref[0]).astype(jnp.bfloat16)
    qkv = jnp.dot(h, wqkv_ref[0], preferred_element_type=jnp.float32
                  ).astype(jnp.bfloat16)            # (BT, 3C), single bf16 cast

    row = lax.broadcasted_iota(jnp.int32, (batch, T, T), 1)
    col = lax.broadcasted_iota(jnp.int32, (batch, T, T), 2)
    causal = col <= row

    # TODO(synk): for real block_size (T >~ 512) switch this to a flash-style
    # online-softmax tiled over KV instead of materializing (B, T, T) scores.
    outs = []
    for hd in range(n_head):                        # static, small head loop
        q = qkv[:, hd * hs:(hd + 1) * hs].reshape(batch, T, hs)
        k = qkv[:, C + hd * hs:C + (hd + 1) * hs].reshape(batch, T, hs)
        v = qkv[:, 2 * C + hd * hs:2 * C + (hd + 1) * hs].reshape(batch, T, hs)

        s = jnp.einsum('bqd,bkd->bqk', q, k, preferred_element_type=jnp.float32)
        s = jnp.where(causal, s, NEG_BIG)
        m = jnp.max(s, axis=-1, keepdims=True)
        e = jnp.exp(s - m)
        p = e / jnp.sum(e, axis=-1, keepdims=True)  # exact division (f32)
        o = jnp.einsum('bqk,bkd->bqd', p.astype(jnp.bfloat16), v,
                       preferred_element_type=jnp.float32)
        outs.append(o.reshape(BT, hs))

    # single K=C output projection (no per-head K=hs matmuls)
    head_cat = jnp.concatenate(outs, axis=-1).astype(jnp.bfloat16)    # (BT, C)
    sa = jnp.dot(head_cat, wp_ref[0], preferred_element_type=jnp.float32)  # (BT, Cp)
    x = x + sa + bp_ref[0]

    # --- feed-forward ---
    h2 = layer_norm(x, ln2g_ref[0], ln2b_ref[0]).astype(jnp.bfloat16)
    ff = jnp.dot(h2, w1_ref[0], preferred_element_type=jnp.float32) + b1_ref[0]
    ff = jnp.maximum(ff, 0.0).astype(jnp.bfloat16)
    ff = jnp.dot(ff, w2_ref[0], preferred_element_type=jnp.float32) + b2_ref[0]
    x = x + ff

    resid_ref[...] = x

    # last layer: fuse ln_f into the epilogue; store normalized bf16 activations
    @pl.when(layer == pl.num_programs(0) - 1)
    def _():
        out_ref[...] = layer_norm(x, lnfg_ref[...], lnfb_ref[...]).astype(jnp.bfloat16)


def lm_head_kernel(h_ref, w_ref, bias_ref, out_ref):
    """Pure vocab-tiled matmul: (BT, Cp) @ (Cp, TILE_V) + bias.  No LayerNorm here."""
    out_ref[...] = (jnp.dot(h_ref[...], w_ref[...],
                            preferred_element_type=jnp.float32) + bias_ref[...])


# ------------------------------- wrappers ------------------------------------
def run_blocks(x2d, kp, *, batch):
    BT, Cp = x2d.shape
    L = kp["n_layer"]
    C, Fp = kp["c_real"], kp["f_pad"]
    kernel = functools.partial(gpt_blocks_kernel, batch=batch, n_head=kp["n_head"],
                               head_size=kp["head_size"], c_real=C)
    vec_spec = pl.BlockSpec((1, 1, Cp), lambda l: (l, 0, 0))
    return pl.pallas_call(
        kernel,
        out_shape=jax.ShapeDtypeStruct((BT, Cp), jnp.bfloat16),
        grid=(L,),
        in_specs=[
            pl.BlockSpec((BT, Cp), lambda l: (0, 0)),          # residual input (resident)
            vec_spec, vec_spec,                                 # ln1 gamma / beta
            pl.BlockSpec((1, Cp, 3 * C), lambda l: (l, 0, 0)),  # fused QKV weight
            pl.BlockSpec((1, C, Cp), lambda l: (l, 0, 0)),      # output projection
            vec_spec,                                           # proj bias
            vec_spec, vec_spec,                                 # ln2 gamma / beta
            pl.BlockSpec((1, Cp, Fp), lambda l: (l, 0, 0)),     # FFN w1
            pl.BlockSpec((1, 1, Fp), lambda l: (l, 0, 0)),      # FFN b1
            pl.BlockSpec((1, Fp, Cp), lambda l: (l, 0, 0)),     # FFN w2
            vec_spec,                                           # FFN b2
            pl.BlockSpec((1, Cp), lambda l: (0, 0)),            # ln_f gamma
            pl.BlockSpec((1, Cp), lambda l: (0, 0)),            # ln_f beta
        ],
        out_specs=pl.BlockSpec((BT, Cp), lambda l: (0, 0)),
        scratch_shapes=[pltpu.VMEM((BT, Cp), jnp.float32)],     # residual, VMEM-resident
        compiler_params=pltpu.CompilerParams(
            dimension_semantics=("arbitrary",),                 # sequential over layers
            vmem_limit_bytes=VMEM_LIMIT),
    )(x2d, kp["ln1_g"], kp["ln1_b"], kp["wqkv"], kp["wp"], kp["bp"],
      kp["ln2_g"], kp["ln2_b"], kp["w1"], kp["b1"], kp["w2"], kp["b2"],
      kp["lnf_g"], kp["lnf_b"])


def run_lm_head(h2d, w, bias, *, tile_v):
    BT, Cp = h2d.shape
    V_pad = w.shape[1]
    n_tiles = V_pad // tile_v
    # TODO(synk): at real batch sizes add a BT tile as a second ("parallel") grid axis
    # so v7x's second TensorCore is used; at BT=16 the grid is collapsed on purpose.
    return pl.pallas_call(
        lm_head_kernel,
        out_shape=jax.ShapeDtypeStruct((BT, V_pad), jnp.float32),
        grid=(n_tiles,),
        in_specs=[
            pl.BlockSpec((BT, Cp), lambda v: (0, 0)),      # normalized activations
            pl.BlockSpec((Cp, tile_v), lambda v: (0, v)),  # vocab tile of W
            pl.BlockSpec((tile_v,), lambda v: (v,)),       # vocab tile of bias
        ],
        out_specs=pl.BlockSpec((BT, tile_v), lambda v: (0, v)),
        compiler_params=pltpu.CompilerParams(
            dimension_semantics=("parallel",),
            vmem_limit_bytes=VMEM_LIMIT),
    )(h2d, w, bias)


def gpt_forward(idx, kp):
    """GPTLanguageModel.forward with targets=None. Returns logits (B, T, vocab)."""
    B, T = idx.shape
    C, Cp = kp["c_real"], kp["c_pad"]
    tok_emb = kp["tok_emb"][idx]                         # (B, T, C) -- glue gather
    pos_emb = kp["pos_emb"][:T]                          # (T, C)
    x = (tok_emb + pos_emb[None, :, :]).reshape(B * T, C)
    x = jnp.pad(x, ((0, 0), (0, Cp - C)))                # lane-pad residual to Cp
    h = run_blocks(x, kp, batch=B)                       # (BT, Cp) bf16, ln_f applied
    logits = run_lm_head(h, kp["w_lm"], kp["b_lm"], tile_v=kp["tile_v"])
    return logits.reshape(B, T, -1)[:, :, :kp["vocab"]]  # drop vocab padding


# --------------------- host-side parameter re-layout -------------------------
def prepare_params(params):
    """Reference (f32, per-head) params -> padded / stacked kernel layout.

    - W_q/W_k/W_v fused into one (Cp, 3C) bf16 W_qkv per layer; 1/sqrt(hs) in Q cols.
    - Channel dim padded to Cp = round_up(C, 128); FFN hidden to Fp; gamma/beta/bias
      pads are zero so padded lanes stay exactly zero through the stack.
    - Per-layer params stacked along a leading layer axis for the fused-layers grid.
    - lm_head padded to a lane-multiple vocab for lane-dense stores.
    - Matmul weights bf16 (f32 accumulation in-kernel); LN params / biases stay f32.
    """
    C = params["tok_emb"].shape[1]
    Cp = _round_up(C, LANE)
    Fp = _round_up(4 * C, LANE)
    V = params["w_lm"].shape[1]
    n_head = params["blocks"][0]["wq"].shape[0]
    hs = C // n_head
    tile_v = min(512, _round_up(V, LANE))      # wider tiles once vocab is real
    V_pad = _round_up(V, tile_v)

    def pad2(a, shape):
        return jnp.zeros(shape, jnp.float32).at[:a.shape[0], :a.shape[1]].set(a)

    def pad1(a, n):
        return jnp.zeros((n,), jnp.float32).at[:a.shape[0]].set(a)

    ln1_g, ln1_b, wqkv, wp, bp = [], [], [], [], []
    ln2_g, ln2_b, w1, b1, w2, b2 = [], [], [], [], [], []
    for p in params["blocks"]:
        scale = float(hs) ** -0.5
        wq = jnp.transpose(p["wq"], (1, 0, 2)).reshape(C, C) * scale
        wk = jnp.transpose(p["wk"], (1, 0, 2)).reshape(C, C)
        wv = jnp.transpose(p["wv"], (1, 0, 2)).reshape(C, C)
        wqkv.append(pad2(jnp.concatenate([wq, wk, wv], axis=1), (Cp, 3 * C)))
        wp.append(pad2(p["wp"], (C, Cp)))
        bp.append(pad1(p["bp"], Cp))
        ln1_g.append(pad1(p["ln1_g"], Cp)); ln1_b.append(pad1(p["ln1_b"], Cp))
        ln2_g.append(pad1(p["ln2_g"], Cp)); ln2_b.append(pad1(p["ln2_b"], Cp))
        w1.append(pad2(p["w1"], (Cp, Fp)));  b1.append(pad1(p["b1"], Fp))
        w2.append(pad2(p["w2"], (Fp, Cp)));  b2.append(pad1(p["b2"], Cp))

    st = jnp.stack
    # TODO(synk): on v7x, optionally store w1/w2/w_lm as fp8 (e4m3) for 2x MXU rate.
    return dict(
        tok_emb=params["tok_emb"], pos_emb=params["pos_emb"],
        vocab=V, c_real=C, c_pad=Cp, f_pad=Fp, tile_v=tile_v,
        n_layer=len(params["blocks"]), n_head=n_head, head_size=hs,
        ln1_g=st(ln1_g)[:, None, :], ln1_b=st(ln1_b)[:, None, :],
        wqkv=st(wqkv).astype(jnp.bfloat16),
        wp=st(wp).astype(jnp.bfloat16),
        bp=st(bp)[:, None, :],
        ln2_g=st(ln2_g)[:, None, :], ln2_b=st(ln2_b)[:, None, :],
        w1=st(w1).astype(jnp.bfloat16), b1=st(b1)[:, None, :],
        w2=st(w2).astype(jnp.bfloat16), b2=st(b2)[:, None, :],
        lnf_g=pad1(params["lnf_g"], Cp)[None, :],
        lnf_b=pad1(params["lnf_b"], Cp)[None, :],
        w_lm=pad2(params["w_lm"], (Cp, V_pad)).astype(jnp.bfloat16),
        b_lm=pad1(params["b_lm"], V_pad),
    )


# ---------------------------- pure-JAX reference -----------------------------
def _ref_forward(idx, params):
    hi = jax.lax.Precision.HIGHEST

    def ln(x, g, b):
        m = x.mean(-1, keepdims=True)
        v = ((x - m) ** 2).mean(-1, keepdims=True)
        return (x - m) / jnp.sqrt(v + LN_EPS) * g + b

    B, T = idx.shape
    x = params["tok_emb"][idx] + params["pos_emb"][:T][None]
    causal = jnp.tril(jnp.ones((T, T), bool))
    for p in params["blocks"]:
        h = ln(x, p["ln1_g"], p["ln1_b"])
        outs = []
        n_head, _, hs = p["wq"].shape
        for hd in range(n_head):
            q = jnp.einsum("btc,cd->btd", h, p["wq"][hd], precision=hi)
            k = jnp.einsum("btc,cd->btd", h, p["wk"][hd], precision=hi)
            v = jnp.einsum("btc,cd->btd", h, p["wv"][hd], precision=hi)
            wei = jnp.einsum("bqd,bkd->bqk", q, k, precision=hi) * hs ** -0.5
            wei = jnp.where(causal, wei, -jnp.inf)
            wei = jax.nn.softmax(wei, axis=-1)
            outs.append(jnp.einsum("bqk,bkd->bqd", wei, v, precision=hi))
        sa = jnp.einsum("btc,cd->btd", jnp.concatenate(outs, -1), p["wp"],
                        precision=hi) + p["bp"]
        x = x + sa
        h2 = ln(x, p["ln2_g"], p["ln2_b"])
        ff = jax.nn.relu(jnp.einsum("btc,cd->btd", h2, p["w1"], precision=hi) + p["b1"])
        ff = jnp.einsum("btc,cd->btd", ff, p["w2"], precision=hi) + p["b2"]
        x = x + ff
    h = ln(x, params["lnf_g"], params["lnf_b"])
    return jnp.einsum("btc,cv->btv", h, params["w_lm"], precision=hi) + params["b_lm"]


# ------------------------------ parameter init --------------------------------
def init_params(key, vocab_size, n_embd, block_size, n_head, n_layer):
    hs = n_embd // n_head
    keys = iter(jax.random.split(key, 16 + 16 * n_layer))

    def nrm(shape, scale=0.02):
        return (scale * jax.random.normal(next(keys), shape)).astype(jnp.float32)

    ones = lambda s: jnp.ones(s, jnp.float32)
    zeros = lambda s: jnp.zeros(s, jnp.float32)

    blocks = []
    for _ in range(n_layer):
        blocks.append(dict(
            ln1_g=ones((n_embd,)), ln1_b=zeros((n_embd,)),
            wq=nrm((n_head, n_embd, hs)), wk=nrm((n_head, n_embd, hs)),
            wv=nrm((n_head, n_embd, hs)),
            wp=nrm((n_embd, n_embd)), bp=nrm((n_embd,)),
            ln2_g=ones((n_embd,)), ln2_b=zeros((n_embd,)),
            w1=nrm((n_embd, 4 * n_embd)), b1=nrm((4 * n_embd,)),
            w2=nrm((4 * n_embd, n_embd)), b2=nrm((n_embd,)),
        ))
    return dict(
        tok_emb=nrm((vocab_size, n_embd)),
        pos_emb=nrm((block_size, n_embd)),
        blocks=blocks,
        lnf_g=ones((n_embd,)), lnf_b=zeros((n_embd,)),
        w_lm=nrm((n_embd, vocab_size)), b_lm=nrm((vocab_size,)),
    )


# ----------------------------------- main -------------------------------------
if __name__ == "__main__":
    vocab_size, n_embd, block_size, n_head, n_layer = 64, 32, 8, 4, 2
    B, T = 2, 8   # dropout = 0.0 (eval semantics); targets=None -> no loss path

    root = jax.random.PRNGKey(0)
    k_param, k_idx = jax.random.split(root)
    params = init_params(k_param, vocab_size, n_embd, block_size, n_head, n_layer)
    kparams = prepare_params(params)
    idx = jax.random.randint(k_idx, (B, T), 0, vocab_size, dtype=jnp.int32)

    logits = gpt_forward(idx, kparams)
    logits = jax.block_until_ready(logits)

    assert logits.shape == (B, T, vocab_size)
    assert bool(jnp.all(jnp.isfinite(logits)))

    ref = _ref_forward(idx, params)
    max_err = float(jnp.max(jnp.abs(logits - ref)))
    assert bool(jnp.allclose(logits, ref, atol=2e-2, rtol=2e-2)), (
        f"mismatch vs JAX reference (max abs err {max_err})")

    # TODO(synk): cross-entropy loss branch (targets!=None) and autoregressive
    # generate() loop with multinomial sampling are host-side control flow and
    # are intentionally left outside the Pallas kernels.
    print("KERNEL_OK")
</pallas_src>

<mosaic_0001>
module attributes {stable_mosaic.version = 11 : i64} {
  func.func @gpt_blocks_kernel(%arg0: i32, %arg1: memref<16x128xf32, #tpu.memory_space<vmem>>, %arg2: memref<1x1x128xf32, #tpu.memory_space<vmem>>, %arg3: memref<1x1x128xf32, #tpu.memory_space<vmem>>, %arg4: memref<1x128x96xbf16, #tpu.memory_space<vmem>>, %arg5: memref<1x32x128xbf16, #tpu.memory_space<vmem>>, %arg6: memref<1x1x128xf32, #tpu.memory_space<vmem>>, %arg7: memref<1x1x128xf32, #tpu.memory_space<vmem>>, %arg8: memref<1x1x128xf32, #tpu.memory_space<vmem>>, %arg9: memref<1x128x128xbf16, #tpu.memory_space<vmem>>, %arg10: memref<1x1x128xf32, #tpu.memory_space<vmem>>, %arg11: memref<1x128x128xbf16, #tpu.memory_space<vmem>>, %arg12: memref<1x1x128xf32, #tpu.memory_space<vmem>>, %arg13: memref<1x128xf32, #tpu.memory_space<vmem>>, %arg14: memref<1x128xf32, #tpu.memory_space<vmem>>, %arg15: memref<16x128xbf16, #tpu.memory_space<vmem>>, %arg16: memref<16x128xf32, #tpu.memory_space<vmem>>) attributes {dimension_semantics = [#tpu.dimension_semantics<arbitrary>], iteration_bounds = array<i64: 2>, scalar_prefetch = 0 : i64, scratch_operands = 1 : i64, tpu.core_type = #tpu.core_type<tc>, window_params = [{pipeline_mode = #tpu.pipeline_mode<synchronous>, transform_indices = @transform_0, window_bounds = array<i64: 16, 128>}, {transform_indices = @transform_1, window_bounds = array<i64: 1, 1, 128>}, {transform_indices = @transform_2, window_bounds = array<i64: 1, 1, 128>}, {transform_indices = @transform_3, window_bounds = array<i64: 1, 128, 96>}, {transform_indices = @transform_4, window_bounds = array<i64: 1, 32, 128>}, {transform_indices = @transform_5, window_bounds = array<i64: 1, 1, 128>}, {transform_indices = @transform_6, window_bounds = array<i64: 1, 1, 128>}, {transform_indices = @transform_7, window_bounds = array<i64: 1, 1, 128>}, {transform_indices = @transform_8, window_bounds = array<i64: 1, 128, 128>}, {transform_indices = @transform_9, window_bounds = array<i64: 1, 1, 128>}, {transform_indices = @transform_10, window_bounds = array<i64: 1, 128, 128>}, {transform_indices = @transform_11, window_bounds = array<i64: 1, 1, 128>}, {pipeline_mode = #tpu.pipeline_mode<synchronous>, transform_indices = @transform_12, window_bounds = array<i64: 1, 128>}, {pipeline_mode = #tpu.pipeline_mode<synchronous>, transform_indices = @transform_13, window_bounds = array<i64: 1, 128>}, {pipeline_mode = #tpu.pipeline_mode<synchronous>, transform_indices = @transform_14, window_bounds = array<i64: 16, 128>}]} {
    %c0_i32 = arith.constant 0 : i32
    %0 = arith.cmpi eq, %arg0, %c0_i32 : i32
    %1 = arith.extui %0 : i1 to i32
    %c0_i32_0 = arith.constant 0 : i32
    %2 = arith.cmpi ne, %1, %c0_i32_0 : i32
    scf.if %2 {
      %c0_74 = arith.constant 0 : index
      %c0_75 = arith.constant 0 : index
      %188 = vector.load %arg1[%c0_74, %c0_75] : memref<16x128xf32, #tpu.memory_space<vmem>>, vector<16x128xf32>
      %c0_76 = arith.constant 0 : index
      %c0_77 = arith.constant 0 : index
      %189 = vector.load %arg16[%c0_76, %c0_77] : memref<16x128xf32, #tpu.memory_space<vmem>>, vector<16x128xf32>
      tpu.vector_store %arg16[%c0_76, %c0_77], %188 {strides = array<i32>} : memref<16x128xf32, #tpu.memory_space<vmem>>, vector<16x128xf32>,
    } else {
    }
    %c0 = arith.constant 0 : index
    %c0_1 = arith.constant 0 : index
    %3 = vector.load %arg16[%c0, %c0_1] : memref<16x128xf32, #tpu.memory_space<vmem>>, vector<16x128xf32>
    %4 = tpu.iota {dimensions = array<i32: 1>} : vector<1x128xi32>
    %c32_i32 = arith.constant 32 : i32
    %5 = vector.broadcast %c32_i32 : i32 to vector<1x128xi32>
    %6 = arith.cmpi slt, %4, %5 : vector<1x128xi32>
    %c0_2 = arith.constant 0 : index
    %c0_3 = arith.constant 0 : index
    %c0_4 = arith.constant 0 : index
    %7 = vector.load %arg2[%c0_2, %c0_3, %c0_4] : memref<1x1x128xf32, #tpu.memory_space<vmem>>, vector<1x1x128xf32>
    %8 = vector.shape_cast %7 : vector<1x1x128xf32> to vector<1x128xf32>
    %c0_5 = arith.constant 0 : index
    %c0_6 = arith.constant 0 : index
    %c0_7 = arith.constant 0 : index
    %9 = vector.load %arg3[%c0_5, %c0_6, %c0_7] : memref<1x1x128xf32, #tpu.memory_space<vmem>>, vector<1x1x128xf32>
    %10 = vector.shape_cast %9 : vector<1x1x128xf32> to vector<1x128xf32>
    %cst = arith.constant dense<0.000000e+00> : vector<16xf32>
    %11 = vector.multi_reduction <add>, %3, %cst [1] : vector<16x128xf32> to vector<16xf32>
    %12 = vector.shape_cast %11 : vector<16xf32> to vector<16x1xf32>
    %cst_8 = arith.constant 3.125000e-02 : f32
    %13 = vector.broadcast %cst_8 : f32 to vector<16x1xf32>
    %14 = arith.mulf %12, %13 : vector<16x1xf32>
    %15 = vector.broadcast %14 : vector<16x1xf32> to vector<16x128xf32>
    %16 = arith.subf %3, %15 : vector<16x128xf32>
    %cst_9 = arith.constant 0.000000e+00 : f32
    %17 = vector.shape_cast %6 : vector<1x128xi1> to vector<1x128xi1>
    %18 = vector.broadcast %17 : vector<1x128xi1> to vector<16x128xi1>
    %19 = vector.broadcast %cst_9 : f32 to vector<16x128xf32>
    %20 = arith.select %18, %16, %19 : vector<16x128xi1>, vector<16x128xf32>
    %21 = arith.mulf %20, %20 : vector<16x128xf32>
    %cst_10 = arith.constant dense<0.000000e+00> : vector<16xf32>
    %22 = vector.multi_reduction <add>, %21, %cst_10 [1] : vector<16x128xf32> to vector<16xf32>
    %23 = vector.shape_cast %22 : vector<16xf32> to vector<16x1xf32>
    %cst_11 = arith.constant 3.125000e-02 : f32
    %24 = vector.broadcast %cst_11 : f32 to vector<16x1xf32>
    %25 = arith.mulf %23, %24 : vector<16x1xf32>
    %cst_12 = arith.constant 9.99999974E-6 : f32
    %26 = vector.broadcast %cst_12 : f32 to vector<16x1xf32>
    %27 = arith.addf %25, %26 : vector<16x1xf32>
    %28 = math.rsqrt %27 : vector<16x1xf32>
    %29 = vector.broadcast %28 : vector<16x1xf32> to vector<16x128xf32>
    %30 = arith.mulf %20, %29 : vector<16x128xf32>
    %31 = vector.broadcast %8 : vector<1x128xf32> to vector<16x128xf32>
    %32 = arith.mulf %30, %31 : vector<16x128xf32>
    %33 = vector.broadcast %10 : vector<1x128xf32> to vector<16x128xf32>
    %34 = arith.addf %32, %33 : vector<16x128xf32>
    %35 = arith.truncf %34 : vector<16x128xf32> to vector<16x128xbf16>
    %c0_13 = arith.constant 0 : index
    %c0_14 = arith.constant 0 : index
    %c0_15 = arith.constant 0 : index
    %36 = vector.load %arg4[%c0_13, %c0_14, %c0_15] : memref<1x128x96xbf16, #tpu.memory_space<vmem>>, vector<1x128x96xbf16>
    %37 = vector.shape_cast %36 : vector<1x128x96xbf16> to vector<128x96xbf16>
    %cst_16 = arith.constant dense<0.000000e+00> : vector<16x96xf32>
    %38 = tpu.matmul %35, %37, %cst_16 {dimension_numbers = #tpu.dot_dimension_numbers<[1], [0], [0], [1], [0, 0, 1, 1], [], []>} : vector<16x128xbf16>, vector<128x96xbf16>, vector<16x96xf32> -> vector<16x96xf32>
    %39 = arith.truncf %38 : vector<16x96xf32> to vector<16x96xbf16>
    %40 = tpu.iota {dimensions = array<i32: 1>} : vector<2x8x8xi32>
    %41 = tpu.iota {dimensions = array<i32: 2>} : vector<2x8x8xi32>
    %42 = arith.cmpi sle, %41, %40 : vector<2x8x8xi32>
    %43 = vector.extract_strided_slice %39 {offsets = [0, 0], sizes = [16, 8], strides = [1, 1]} : vector<16x96xbf16> to vector<16x8xbf16>
    %44 = vector.shape_cast %43 : vector<16x8xbf16> to vector<2x8x8xbf16>
    %45 = vector.extract_strided_slice %39 {offsets = [0, 32], sizes = [16, 8], strides = [1, 1]} : vector<16x96xbf16> to vector<16x8xbf16>
    %46 = vector.shape_cast %45 : vector<16x8xbf16> to vector<2x8x8xbf16>
    %47 = vector.extract_strided_slice %39 {offsets = [0, 64], sizes = [16, 8], strides = [1, 1]} : vector<16x96xbf16> to vector<16x8xbf16>
    %48 = vector.shape_cast %47 : vector<16x8xbf16> to vector<2x8x8xbf16>
    "tpu.trace_start"() <{level = 10 : i32, message = "bqd,bkd->bqk"}> : () -> ()
    %cst_17 = arith.constant dense<0.000000e+00> : vector<2x8x8xf32>
    %49 = tpu.matmul %44, %46, %cst_17 {dimension_numbers = #tpu.dot_dimension_numbers<[2], [2], [1], [1], [0, 0, 0, 1, 1, 1], [0], [0]>} : vector<2x8x8xbf16>, vector<2x8x8xbf16>, vector<2x8x8xf32> -> vector<2x8x8xf32>
    %cst_18 = arith.constant -1.000000e+30 : f32
    "tpu.trace_stop"() : () -> ()
    %50 = vector.broadcast %cst_18 : f32 to vector<2x8x8xf32>
    %51 = arith.select %42, %49, %50 : vector<2x8x8xi1>, vector<2x8x8xf32>
    %cst_19 = arith.constant dense<0xFF800000> : vector<2x8xf32>
    %52 = vector.multi_reduction <maximumf>, %51, %cst_19 [2] : vector<2x8x8xf32> to vector<2x8xf32>
    %53 = vector.shape_cast %52 : vector<2x8xf32> to vector<2x8x1xf32>
    %54 = vector.broadcast %53 : vector<2x8x1xf32> to vector<2x8x8xf32>
    %55 = arith.subf %51, %54 : vector<2x8x8xf32>
    %56 = math.exp %55 : vector<2x8x8xf32>
    %cst_20 = arith.constant dense<0.000000e+00> : vector<2x8xf32>
    %57 = vector.multi_reduction <add>, %56, %cst_20 [2] : vector<2x8x8xf32> to vector<2x8xf32>
    %58 = vector.shape_cast %57 : vector<2x8xf32> to vector<2x8x1xf32>
    %59 = vector.broadcast %58 : vector<2x8x1xf32> to vector<2x8x8xf32>
    %60 = arith.divf %56, %59 : vector<2x8x8xf32>
    %61 = arith.truncf %60 : vector<2x8x8xf32> to vector<2x8x8xbf16>
    "tpu.trace_start"() <{level = 10 : i32, message = "bqk,bkd->bqd"}> : () -> ()
    %cst_21 = arith.constant dense<0.000000e+00> : vector<2x8x8xf32>
    %62 = tpu.matmul %61, %48, %cst_21 {dimension_numbers = #tpu.dot_dimension_numbers<[2], [1], [1], [2], [0, 0, 0, 1, 1, 2], [0], [0]>} : vector<2x8x8xbf16>, vector<2x8x8xbf16>, vector<2x8x8xf32> -> vector<2x8x8xf32>
    "tpu.trace_stop"() : () -> ()
    %63 = vector.shape_cast %62 : vector<2x8x8xf32> to vector<16x8xf32>
    %64 = vector.extract_strided_slice %39 {offsets = [0, 8], sizes = [16, 8], strides = [1, 1]} : vector<16x96xbf16> to vector<16x8xbf16>
    %65 = vector.shape_cast %64 : vector<16x8xbf16> to vector<2x8x8xbf16>
    %66 = vector.extract_strided_slice %39 {offsets = [0, 40], sizes = [16, 8], strides = [1, 1]} : vector<16x96xbf16> to vector<16x8xbf16>
    %67 = vector.shape_cast %66 : vector<16x8xbf16> to vector<2x8x8xbf16>
    %68 = vector.extract_strided_slice %39 {offsets = [0, 72], sizes = [16, 8], strides = [1, 1]} : vector<16x96xbf16> to vector<16x8xbf16>
    %69 = vector.shape_cast %68 : vector<16x8xbf16> to vector<2x8x8xbf16>
    "tpu.trace_start"() <{level = 10 : i32, message = "bqd,bkd->bqk"}> : () -> ()
    %cst_22 = arith.constant dense<0.000000e+00> : vector<2x8x8xf32>
    %70 = tpu.matmul %65, %67, %cst_22 {dimension_numbers = #tpu.dot_dimension_numbers<[2], [2], [1], [1], [0, 0, 0, 1, 1, 1], [0], [0]>} : vector<2x8x8xbf16>, vector<2x8x8xbf16>, vector<2x8x8xf32> -> vector<2x8x8xf32>
    %cst_23 = arith.constant -1.000000e+30 : f32
    "tpu.trace_stop"() : () -> ()
    %71 = vector.broadcast %cst_23 : f32 to vector<2x8x8xf32>
    %72 = arith.select %42, %70, %71 : vector<2x8x8xi1>, vector<2x8x8xf32>
    %cst_24 = arith.constant dense<0xFF800000> : vector<2x8xf32>
    %73 = vector.multi_reduction <maximumf>, %72, %cst_24 [2] : vector<2x8x8xf32> to vector<2x8xf32>
    %74 = vector.shape_cast %73 : vector<2x8xf32> to vector<2x8x1xf32>
    %75 = vector.broadcast %74 : vector<2x8x1xf32> to vector<2x8x8xf32>
    %76 = arith.subf %72, %75 : vector<2x8x8xf32>
    %77 = math.exp %76 : vector<2x8x8xf32>
    %cst_25 = arith.constant dense<0.000000e+00> : vector<2x8xf32>
    %78 = vector.multi_reduction <add>, %77, %cst_25 [2] : vector<2x8x8xf32> to vector<2x8xf32>
    %79 = vector.shape_cast %78 : vector<2x8xf32> to vector<2x8x1xf32>
    %80 = vector.broadcast %79 : vector<2x8x1xf32> to vector<2x8x8xf32>
    %81 = arith.divf %77, %80 : vector<2x8x8xf32>
    %82 = arith.truncf %81 : vector<2x8x8xf32> to vector<2x8x8xbf16>
    "tpu.trace_start"() <{level = 10 : i32, message = "bqk,bkd->bqd"}> : () -> ()
    %cst_26 = arith.constant dense<0.000000e+00> : vector<2x8x8xf32>
    %83 = tpu.matmul %82, %69, %cst_26 {dimension_numbers = #tpu.dot_dimension_numbers<[2], [1], [1], [2], [0, 0, 0, 1, 1, 2], [0], [0]>} : vector<2x8x8xbf16>, vector<2x8x8xbf16>, vector<2x8x8xf32> -> vector<2x8x8xf32>
    "tpu.trace_stop"() : () -> ()
    %84 = vector.shape_cast %83 : vector<2x8x8xf32> to vector<16x8xf32>
    %85 = vector.extract_strided_slice %39 {offsets = [0, 16], sizes = [16, 8], strides = [1, 1]} : vector<16x96xbf16> to vector<16x8xbf16>
    %86 = vector.shape_cast %85 : vector<16x8xbf16> to vector<2x8x8xbf16>
    %87 = vector.extract_strided_slice %39 {offsets = [0, 48], sizes = [16, 8], strides = [1, 1]} : vector<16x96xbf16> to vector<16x8xbf16>
    %88 = vector.shape_cast %87 : vector<16x8xbf16> to vector<2x8x8xbf16>
    %89 = vector.extract_strided_slice %39 {offsets = [0, 80], sizes = [16, 8], strides = [1, 1]} : vector<16x96xbf16> to vector<16x8xbf16>
    %90 = vector.shape_cast %89 : vector<16x8xbf16> to vector<2x8x8xbf16>
    "tpu.trace_start"() <{level = 10 : i32, message = "bqd,bkd->bqk"}> : () -> ()
    %cst_27 = arith.constant dense<0.000000e+00> : vector<2x8x8xf32>
    %91 = tpu.matmul %86, %88, %cst_27 {dimension_numbers = #tpu.dot_dimension_numbers<[2], [2], [1], [1], [0, 0, 0, 1, 1, 1], [0], [0]>} : vector<2x8x8xbf16>, vector<2x8x8xbf16>, vector<2x8x8xf32> -> vector<2x8x8xf32>
    %cst_28 = arith.constant -1.000000e+30 : f32
    "tpu.trace_stop"() : () -> ()
    %92 = vector.broadcast %cst_28 : f32 to vector<2x8x8xf32>
    %93 = arith.select %42, %91, %92 : vector<2x8x8xi1>, vector<2x8x8xf32>
    %cst_29 = arith.constant dense<0xFF800000> : vector<2x8xf32>
    %94 = vector.multi_reduction <maximumf>, %93, %cst_29 [2] : vector<2x8x8xf32> to vector<2x8xf32>
    %95 = vector.shape_cast %94 : vector<2x8xf32> to vector<2x8x1xf32>
    %96 = vector.broadcast %95 : vector<2x8x1xf32> to vector<2x8x8xf32>
    %97 = arith.subf %93, %96 : vector<2x8x8xf32>
    %98 = math.exp %97 : vector<2x8x8xf32>
    %cst_30 = arith.constant dense<0.000000e+00> : vector<2x8xf32>
    %99 = vector.multi_reduction <add>, %98, %cst_30 [2] : vector<2x8x8xf32> to vector<2x8xf32>
    %100 = vector.shape_cast %99 : vector<2x8xf32> to vector<2x8x1xf32>
    %101 = vector.broadcast %100 : vector<2x8x1xf32> to vector<2x8x8xf32>
    %102 = arith.divf %98, %101 : vector<2x8x8xf32>
    %103 = arith.truncf %102 : vector<2x8x8xf32> to vector<2x8x8xbf16>
    "tpu.trace_start"() <{level = 10 : i32, message = "bqk,bkd->bqd"}> : () -> ()
    %cst_31 = arith.constant dense<0.000000e+00> : vector<2x8x8xf32>
    %104 = tpu.matmul %103, %90, %cst_31 {dimension_numbers = #tpu.dot_dimension_numbers<[2], [1], [1], [2], [0, 0, 0, 1, 1, 2], [0], [0]>} : vector<2x8x8xbf16>, vector<2x8x8xbf16>, vector<2x8x8xf32> -> vector<2x8x8xf32>
    "tpu.trace_stop"() : () -> ()
    %105 = vector.shape_cast %104 : vector<2x8x8xf32> to vector<16x8xf32>
    %106 = vector.extract_strided_slice %39 {offsets = [0, 24], sizes = [16, 8], strides = [1, 1]} : vector<16x96xbf16> to vector<16x8xbf16>
    %107 = vector.shape_cast %106 : vector<16x8xbf16> to vector<2x8x8xbf16>
    %108 = vector.extract_strided_slice %39 {offsets = [0, 56], sizes = [16, 8], strides = [1, 1]} : vector<16x96xbf16> to vector<16x8xbf16>
    %109 = vector.shape_cast %108 : vector<16x8xbf16> to vector<2x8x8xbf16>
    %110 = vector.extract_strided_slice %39 {offsets = [0, 88], sizes = [16, 8], strides = [1, 1]} : vector<16x96xbf16> to vector<16x8xbf16>
    %111 = vector.shape_cast %110 : vector<16x8xbf16> to vector<2x8x8xbf16>
    "tpu.trace_start"() <{level = 10 : i32, message = "bqd,bkd->bqk"}> : () -> ()
    %cst_32 = arith.constant dense<0.000000e+00> : vector<2x8x8xf32>
    %112 = tpu.matmul %107, %109, %cst_32 {dimension_numbers = #tpu.dot_dimension_numbers<[2], [2], [1], [1], [0, 0, 0, 1, 1, 1], [0], [0]>} : vector<2x8x8xbf16>, vector<2x8x8xbf16>, vector<2x8x8xf32> -> vector<2x8x8xf32>
    %cst_33 = arith.constant -1.000000e+30 : f32
    "tpu.trace_stop"() : () -> ()
    %113 = vector.broadcast %cst_33 : f32 to vector<2x8x8xf32>
    %114 = arith.select %42, %112, %113 : vector<2x8x8xi1>, vector<2x8x8xf32>
    %cst_34 = arith.constant dense<0xFF800000> : vector<2x8xf32>
    %115 = vector.multi_reduction <maximumf>, %114, %cst_34 [2] : vector<2x8x8xf32> to vector<2x8xf32>
    %116 = vector.shape_cast %115 : vector<2x8xf32> to vector<2x8x1xf32>
    %117 = vector.broadcast %116 : vector<2x8x1xf32> to vector<2x8x8xf32>
    %118 = arith.subf %114, %117 : vector<2x8x8xf32>
    %119 = math.exp %118 : vector<2x8x8xf32>
    %cst_35 = arith.constant dense<0.000000e+00> : vector<2x8xf32>
    %120 = vector.multi_reduction <add>, %119, %cst_35 [2] : vector<2x8x8xf32> to vector<2x8xf32>
    %121 = vector.shape_cast %120 : vector<2x8xf32> to vector<2x8x1xf32>
    %122 = vector.broadcast %121 : vector<2x8x1xf32> to vector<2x8x8xf32>
    %123 = arith.divf %119, %122 : vector<2x8x8xf32>
    %124 = arith.truncf %123 : vector<2x8x8xf32> to vector<2x8x8xbf16>
    "tpu.trace_start"() <{level = 10 : i32, message = "bqk,bkd->bqd"}> : () -> ()
    %cst_36 = arith.constant dense<0.000000e+00> : vector<2x8x8xf32>
    %125 = tpu.matmul %124, %111, %cst_36 {dimension_numbers = #tpu.dot_dimension_numbers<[2], [1], [1], [2], [0, 0, 0, 1, 1, 2], [0], [0]>} : vector<2x8x8xbf16>, vector<2x8x8xbf16>, vector<2x8x8xf32> -> vector<2x8x8xf32>
    "tpu.trace_stop"() : () -> ()
    %126 = vector.shape_cast %125 : vector<2x8x8xf32> to vector<16x8xf32>
    %127 = tpu.concatenate %63, %84, %105, %126 in 1 : vector<16x8xf32>, vector<16x8xf32>, vector<16x8xf32>, vector<16x8xf32> -> vector<16x32xf32>
    %128 = arith.truncf %127 : vector<16x32xf32> to vector<16x32xbf16>
    %c0_37 = arith.constant 0 : index
    %c0_38 = arith.constant 0 : index
    %c0_39 = arith.constant 0 : index
    %129 = vector.load %arg5[%c0_37, %c0_38, %c0_39] : memref<1x32x128xbf16, #tpu.memory_space<vmem>>, vector<1x32x128xbf16>
    %130 = vector.shape_cast %129 : vector<1x32x128xbf16> to vector<32x128xbf16>
    %cst_40 = arith.constant dense<0.000000e+00> : vector<16x128xf32>
    %131 = tpu.matmul %128, %130, %cst_40 {dimension_numbers = #tpu.dot_dimension_numbers<[1], [0], [0], [1], [0, 0, 1, 1], [], []>} : vector<16x32xbf16>, vector<32x128xbf16>, vector<16x128xf32> -> vector<16x128xf32>
    %132 = arith.addf %3, %131 : vector<16x128xf32>
    %c0_41 = arith.constant 0 : index
    %c0_42 = arith.constant 0 : index
    %c0_43 = arith.constant 0 : index
    %133 = vector.load %arg6[%c0_41, %c0_42, %c0_43] : memref<1x1x128xf32, #tpu.memory_space<vmem>>, vector<1x1x128xf32>
    %134 = vector.shape_cast %133 : vector<1x1x128xf32> to vector<1x128xf32>
    %135 = vector.broadcast %134 : vector<1x128xf32> to vector<16x128xf32>
    %136 = arith.addf %132, %135 : vector<16x128xf32>
    %c0_44 = arith.constant 0 : index
    %c0_45 = arith.constant 0 : index
    %c0_46 = arith.constant 0 : index
    %137 = vector.load %arg7[%c0_44, %c0_45, %c0_46] : memref<1x1x128xf32, #tpu.memory_space<vmem>>, vector<1x1x128xf32>
    %138 = vector.shape_cast %137 : vector<1x1x128xf32> to vector<1x128xf32>
    %c0_47 = arith.constant 0 : index
    %c0_48 = arith.constant 0 : index
    %c0_49 = arith.constant 0 : index
    %139 = vector.load %arg8[%c0_47, %c0_48, %c0_49] : memref<1x1x128xf32, #tpu.memory_space<vmem>>, vector<1x1x128xf32>
    %140 = vector.shape_cast %139 : vector<1x1x128xf32> to vector<1x128xf32>
    %cst_50 = arith.constant dense<0.000000e+00> : vector<16xf32>
    %141 = vector.multi_reduction <add>, %136, %cst_50 [1] : vector<16x128xf32> to vector<16xf32>
    %142 = vector.shape_cast %141 : vector<16xf32> to vector<16x1xf32>
    %cst_51 = arith.constant 3.125000e-02 : f32
    %143 = vector.broadcast %cst_51 : f32 to vector<16x1xf32>
    %144 = arith.mulf %142, %143 : vector<16x1xf32>
    %145 = vector.broadcast %144 : vector<16x1xf32> to vector<16x128xf32>
    %146 = arith.subf %136, %145 : vector<16x128xf32>
    %cst_52 = arith.constant 0.000000e+00 : f32
    %147 = vector.shape_cast %6 : vector<1x128xi1> to vector<1x128xi1>
    %148 = vector.broadcast %147 : vector<1x128xi1> to vector<16x128xi1>
    %149 = vector.broadcast %cst_52 : f32 to vector<16x128xf32>
    %150 = arith.select %148, %146, %149 : vector<16x128xi1>, vector<16x128xf32>
    %151 = arith.mulf %150, %150 : vector<16x128xf32>
    %cst_53 = arith.constant dense<0.000000e+00> : vector<16xf32>
    %152 = vector.multi_reduction <add>, %151, %cst_53 [1] : vector<16x128xf32> to vector<16xf32>
    %153 = vector.shape_cast %152 : vector<16xf32> to vector<16x1xf32>
    %cst_54 = arith.constant 3.125000e-02 : f32
    %154 = vector.broadcast %cst_54 : f32 to vector<16x1xf32>
    %155 = arith.mulf %153, %154 : vector<16x1xf32>
    %cst_55 = arith.constant 9.99999974E-6 : f32
    %156 = vector.broadcast %cst_55 : f32 to vector<16x1xf32>
    %157 = arith.addf %155, %156 : vector<16x1xf32>
    %158 = math.rsqrt %157 : vector<16x1xf32>
    %159 = vector.broadcast %158 : vector<16x1xf32> to vector<16x128xf32>
    %160 = arith.mulf %150, %159 : vector<16x128xf32>
    %161 = vector.broadcast %138 : vector<1x128xf32> to vector<16x128xf32>
    %162 = arith.mulf %160, %161 : vector<16x128xf32>
    %163 = vector.broadcast %140 : vector<1x128xf32> to vector<16x128xf32>
    %164 = arith.addf %162, %163 : vector<16x128xf32>
    %165 = arith.truncf %164 : vector<16x128xf32> to vector<16x128xbf16>
    %c0_56 = arith.constant 0 : index
    %c0_57 = arith.constant 0 : index
    %c0_58 = arith.constant 0 : index
    %166 = vector.load %arg9[%c0_56, %c0_57, %c0_58] : memref<1x128x128xbf16, #tpu.memory_space<vmem>>, vector<1x128x128xbf16>
    %167 = vector.shape_cast %166 : vector<1x128x128xbf16> to vector<128x128xbf16>
    %cst_59 = arith.constant dense<0.000000e+00> : vector<16x128xf32>
    %168 = tpu.matmul %165, %167, %cst_59 {dimension_numbers = #tpu.dot_dimension_numbers<[1], [0], [0], [1], [0, 0, 1, 1], [], []>} : vector<16x128xbf16>, vector<128x128xbf16>, vector<16x128xf32> -> vector<16x128xf32>
    %c0_60 = arith.constant 0 : index
    %c0_61 = arith.constant 0 : index
    %c0_62 = arith.constant 0 : index
    %169 = vector.load %arg10[%c0_60, %c0_61, %c0_62] : memref<1x1x128xf32, #tpu.memory_space<vmem>>, vector<1x1x128xf32>
    %170 = vector.shape_cast %169 : vector<1x1x128xf32> to vector<1x128xf32>
    %171 = vector.broadcast %170 : vector<1x128xf32> to vector<16x128xf32>
    %172 = arith.addf %168, %171 : vector<16x128xf32>
    %cst_63 = arith.constant 0.000000e+00 : f32
    %173 = vector.broadcast %cst_63 : f32 to vector<16x128xf32>
    %174 = arith.maximumf %172, %173 : vector<16x128xf32>
    %175 = arith.truncf %174 : vector<16x128xf32> to vector<16x128xbf16>
    %c0_64 = arith.constant 0 : index
    %c0_65 = arith.constant 0 : index
    %c0_66 = arith.constant 0 : index
    %176 = vector.load %arg11[%c0_64, %c0_65, %c0_66] : memref<1x128x128xbf16, #tpu.memory_space<vmem>>, vector<1x128x128xbf16>
    %177 = vector.shape_cast %176 : vector<1x128x128xbf16> to vector<128x128xbf16>
    %cst_67 = arith.constant dense<0.000000e+00> : vector<16x128xf32>
    %178 = tpu.matmul %175, %177, %cst_67 {dimension_numbers = #tpu.dot_dimension_numbers<[1], [0], [0], [1], [0, 0, 1, 1], [], []>} : vector<16x128xbf16>, vector<128x128xbf16>, vector<16x128xf32> -> vector<16x128xf32>
    %c0_68 = arith.constant 0 : index
    %c0_69 = arith.constant 0 : index
    %c0_70 = arith.constant 0 : index
    %179 = vector.load %arg12[%c0_68, %c0_69, %c0_70] : memref<1x1x128xf32, #tpu.memory_space<vmem>>, vector<1x1x128xf32>
    %180 = vector.shape_cast %179 : vector<1x1x128xf32> to vector<1x128xf32>
    %181 = vector.broadcast %180 : vector<1x128xf32> to vector<16x128xf32>
    %182 = arith.addf %178, %181 : vector<16x128xf32>
    %183 = arith.addf %136, %182 : vector<16x128xf32>
    %c0_71 = arith.constant 0 : index
    %c0_72 = arith.constant 0 : index
    %184 = vector.load %arg16[%c0_71, %c0_72] : memref<16x128xf32, #tpu.memory_space<vmem>>, vector<16x128xf32>
    tpu.vector_store %arg16[%c0_71, %c0_72], %183 {strides = array<i32>} : memref<16x128xf32, #tpu.memory_space<vmem>>, vector<16x128xf32>,
    %c1_i32 = arith.constant 1 : i32
    %185 = arith.cmpi eq, %arg0, %c1_i32 : i32
    %186 = arith.extui %185 : i1 to i32
    %c0_i32_73 = arith.constant 0 : i32
    %187 = arith.cmpi ne, %186, %c0_i32_73 : i32
    scf.if %187 {
      %c0_74 = arith.constant 0 : index
      %c0_75 = arith.constant 0 : index
      %188 = vector.load %arg13[%c0_74, %c0_75] : memref<1x128xf32, #tpu.memory_space<vmem>>, vector<1x128xf32>
      %c0_76 = arith.constant 0 : index
      %c0_77 = arith.constant 0 : index
      %189 = vector.load %arg14[%c0_76, %c0_77] : memref<1x128xf32, #tpu.memory_space<vmem>>, vector<1x128xf32>
      %cst_78 = arith.constant dense<0.000000e+00> : vector<16xf32>
      %190 = vector.multi_reduction <add>, %183, %cst_78 [1] : vector<16x128xf32> to vector<16xf32>
      %191 = vector.shape_cast %190 : vector<16xf32> to vector<16x1xf32>
      %cst_79 = arith.constant 3.125000e-02 : f32
      %192 = vector.broadcast %cst_79 : f32 to vector<16x1xf32>
      %193 = arith.mulf %191, %192 : vector<16x1xf32>
      %194 = vector.broadcast %193 : vector<16x1xf32> to vector<16x128xf32>
      %195 = arith.subf %183, %194 : vector<16x128xf32>
      %cst_80 = arith.constant 0.000000e+00 : f32
      %196 = vector.shape_cast %6 : vector<1x128xi1> to vector<1x128xi1>
      %197 = vector.broadcast %196 : vector<1x128xi1> to vector<16x128xi1>
      %198 = vector.broadcast %cst_80 : f32 to vector<16x128xf32>
      %199 = arith.select %197, %195, %198 : vector<16x128xi1>, vector<16x128xf32>
      %200 = arith.mulf %199, %199 : vector<16x128xf32>
      %cst_81 = arith.constant dense<0.000000e+00> : vector<16xf32>
      %201 = vector.multi_reduction <add>, %200, %cst_81 [1] : vector<16x128xf32> to vector<16xf32>
      %202 = vector.shape_cast %201 : vector<16xf32> to vector<16x1xf32>
      %cst_82 = arith.constant 3.125000e-02 : f32
      %203 = vector.broadcast %cst_82 : f32 to vector<16x1xf32>
      %204 = arith.mulf %202, %203 : vector<16x1xf32>
      %cst_83 = arith.constant 9.99999974E-6 : f32
      %205 = vector.broadcast %cst_83 : f32 to vector<16x1xf32>
      %206 = arith.addf %204, %205 : vector<16x1xf32>
      %207 = math.rsqrt %206 : vector<16x1xf32>
      %208 = vector.broadcast %207 : vector<16x1xf32> to vector<16x128xf32>
      %209 = arith.mulf %199, %208 : vector<16x128xf32>
      %210 = vector.broadcast %188 : vector<1x128xf32> to vector<16x128xf32>
      %211 = arith.mulf %209, %210 : vector<16x128xf32>
      %212 = vector.broadcast %189 : vector<1x128xf32> to vector<16x128xf32>
      %213 = arith.addf %211, %212 : vector<16x128xf32>
      %214 = arith.truncf %213 : vector<16x128xf32> to vector<16x128xbf16>
      %c0_84 = arith.constant 0 : index
      %c0_85 = arith.constant 0 : index
      %215 = vector.load %arg15[%c0_84, %c0_85] : memref<16x128xbf16, #tpu.memory_space<vmem>>, vector<16x128xbf16>
      tpu.vector_store %arg15[%c0_84, %c0_85], %214 {strides = array<i32>} : memref<16x128xbf16, #tpu.memory_space<vmem>>, vector<16x128xbf16>,
    } else {
    }
    return
  }
  func.func @transform_0(%arg0: i32) -> (i32, i32) {
    %c0_i32 = arith.constant 0 : i32
    %c0_i32_0 = arith.constant 0 : i32
    %c0_i32_1 = arith.constant 0 : i32
    return %c0_i32, %c0_i32_0 : i32, i32
  }
  func.func @transform_1(%arg0: i32) -> (i32, i32, i32) {
    %c0_i32 = arith.constant 0 : i32
    %c0_i32_0 = arith.constant 0 : i32
    %c0_i32_1 = arith.constant 0 : i32
    return %arg0, %c0_i32, %c0_i32_0 : i32, i32, i32
  }
  func.func @transform_2(%arg0: i32) -> (i32, i32, i32) {
    %c0_i32 = arith.constant 0 : i32
    %c0_i32_0 = arith.constant 0 : i32
    %c0_i32_1 = arith.constant 0 : i32
    return %arg0, %c0_i32, %c0_i32_0 : i32, i32, i32
  }
  func.func @transform_3(%arg0: i32) -> (i32, i32, i32) {
    %c0_i32 = arith.constant 0 : i32
    %c0_i32_0 = arith.constant 0 : i32
    %c0_i32_1 = arith.constant 0 : i32
    return %arg0, %c0_i32, %c0_i32_0 : i32, i32, i32
  }
  func.func @transform_4(%arg0: i32) -> (i32, i32, i32) {
    %c0_i32 = arith.constant 0 : i32
    %c0_i32_0 = arith.constant 0 : i32
    %c0_i32_1 = arith.constant 0 : i32
    return %arg0, %c0_i32, %c0_i32_0 : i32, i32, i32
  }
  func.func @transform_5(%arg0: i32) -> (i32, i32, i32) {
    %c0_i32 = arith.constant 0 : i32
    %c0_i32_0 = arith.constant 0 : i32
    %c0_i32_1 = arith.constant 0 : i32
    return %arg0, %c0_i32, %c0_i32_0 : i32, i32, i32
  }
  func.func @transform_6(%arg0: i32) -> (i32, i32, i32) {
    %c0_i32 = arith.constant 0 : i32
    %c0_i32_0 = arith.constant 0 : i32
    %c0_i32_1 = arith.constant 0 : i32
    return %arg0, %c0_i32, %c0_i32_0 : i32, i32, i32
  }
  func.func @transform_7(%arg0: i32) -> (i32, i32, i32) {
    %c0_i32 = arith.constant 0 : i32
    %c0_i32_0 = arith.constant 0 : i32
    %c0_i32_1 = arith.constant 0 : i32
    return %arg0, %c0_i32, %c0_i32_0 : i32, i32, i32
  }
  func.func @transform_8(%arg0: i32) -> (i32, i32, i32) {
    %c0_i32 = arith.constant 0 : i32
    %c0_i32_0 = arith.constant 0 : i32
    %c0_i32_1 = arith.constant 0 : i32
    return %arg0, %c0_i32, %c0_i32_0 : i32, i32, i32
  }
  func.func @transform_9(%arg0: i32) -> (i32, i32, i32) {
    %c0_i32 = arith.constant 0 : i32
    %c0_i32_0 = arith.constant 0 : i32
    %c0_i32_1 = arith.constant 0 : i32
    return %arg0, %c0_i32, %c0_i32_0 : i32, i32, i32
  }
  func.func @transform_10(%arg0: i32) -> (i32, i32, i32) {
    %c0_i32 = arith.constant 0 : i32
    %c0_i32_0 = arith.constant 0 : i32
    %c0_i32_1 = arith.constant 0 : i32
    return %arg0, %c0_i32, %c0_i32_0 : i32, i32, i32
  }
  func.func @transform_11(%arg0: i32) -> (i32, i32, i32) {
    %c0_i32 = arith.constant 0 : i32
    %c0_i32_0 = arith.constant 0 : i32
    %c0_i32_1 = arith.constant 0 : i32
    return %arg0, %c0_i32, %c0_i32_0 : i32, i32, i32
  }
  func.func @transform_12(%arg0: i32) -> (i32, i32) {
    %c0_i32 = arith.constant 0 : i32
    %c0_i32_0 = arith.constant 0 : i32
    %c0_i32_1 = arith.constant 0 : i32
    return %c0_i32, %c0_i32_0 : i32, i32
  }
  func.func @transform_13(%arg0: i32) -> (i32, i32) {
    %c0_i32 = arith.constant 0 : i32
    %c0_i32_0 = arith.constant 0 : i32
    %c0_i32_1 = arith.constant 0 : i32
    return %c0_i32, %c0_i32_0 : i32, i32
  }
  func.func @transform_14(%arg0: i32) -> (i32, i32) {
    %c0_i32 = arith.constant 0 : i32
    %c0_i32_0 = arith.constant 0 : i32
    %c0_i32_1 = arith.constant 0 : i32
    return %c0_i32, %c0_i32_0 : i32, i32
  }
}

</mosaic_0001>

<llo_original>
// kernel: tpu_custom_call.1
$region0: #{tpu_custom_call.1}
  #allocation0 [shape = 'u32[]', space=smem, size = 0x4, offset = 0x4, fixed_abs, tag = 'smem constant byte address 0x4 - core index']
  #allocation1 [shape = 'u32[144,128]{1,0:T(1,128)}', space=vmem, size = 0x12000, scoped, tag = 'internal scratch']
  #allocation2 [shape = 'f32[16,128]{1,0:T(8,128)}', space=vmem, size = 0x2000, scoped, tag = 'scratch operand']
  %s0 = inlined_call_operand.vmem [shape: f32[16,128], index: 0, kind: input, shape index: {}]
  %s1 = inlined_call_operand.vmem [shape: f32[2,1,128], index: 1, kind: input, shape index: {}]
  %s2 = inlined_call_operand.vmem [shape: f32[2,1,128], index: 2, kind: input, shape index: {}]
  %s3 = inlined_call_operand.vmem [shape: bf16[2,128,96], index: 3, kind: input, shape index: {}]
  %s4 = inlined_call_operand.vmem [shape: bf16[2,32,128], index: 4, kind: input, shape index: {}]
  %s5 = inlined_call_operand.vmem [shape: f32[2,1,128], index: 5, kind: input, shape index: {}]
  %s6 = inlined_call_operand.vmem [shape: f32[2,1,128], index: 6, kind: input, shape index: {}]
  %s7 = inlined_call_operand.vmem [shape: f32[2,1,128], index: 7, kind: input, shape index: {}]
  %s8 = inlined_call_operand.vmem [shape: bf16[2,128,128], index: 8, kind: input, shape index: {}]
  %s9 = inlined_call_operand.vmem [shape: f32[2,1,128], index: 9, kind: input, shape index: {}]
  %s10 = inlined_call_operand.hbm [shape: bf16[2,128,128], index: 10, kind: input, shape index: {}]
  %s11 = inlined_call_operand.vmem [shape: f32[2,1,128], index: 11, kind: input, shape index: {}]
  %s12 = inlined_call_operand.vmem [shape: f32[1,128], index: 12, kind: input, shape index: {}]
  %s13 = inlined_call_operand.vmem [shape: f32[1,128], index: 13, kind: input, shape index: {}]
  %s14 = inlined_call_operand.hbm [shape: bf16[16,128], index: 14, kind: output, shape index: {}]
  %s15 = sld [smem:[#allocation0]]
  $region101: #{tpu_custom_call.1} parent=0
    _
  %s17 = ssub.s32 1, %s15
  %s18 = scalar_select 0, %s17, %s15
  $region1: #{tpu_custom_call.1} parent=0
    #allocation3 [shape = 'u8[65536]{0}', space=vmem, size = 0x10000, scoped, tag = 'input window, operand 10']
    #allocation4 [shape = 's32[2]{0}', space=sflag, size = 0x8, scoped, tag = 'scoped memory for tpu_custom_call.1']
    #allocation5 [shape = 's32[2]{0}', space=sflag, size = 0x8, scoped, tag = 'scoped memory for tpu_custom_call.1']
    #allocation6 [shape = 'u8[4096]{0}', space=vmem, size = 0x1000, scoped, tag = 'output window, operand 0, single buffered']
    %19 = vsyncpa [#allocation4], 0
    %s20 = scalar_lea.sflag [#allocation4], 1
    %21 = vsyncpa %s20, 0
    %22 = vsyncpa [#allocation5], 0
    loop: start=0, step=1, limit=4
    $region2: #{tpu_custom_call.1} parent=1 // loop_pre_header
      _
    $region3: #{tpu_custom_call.1} parent=1 // loop_header
      %s24 = sphi 0, %s28
      %p25 = scmp.ge.s32.totalorder %s24, 4
      %s32 = sphi 0, %s32
      %s34 = sphi 0, %s32
      %s35 = sphi 0, %s34
      %s49 = sphi 0, %s35
      %s55 = sphi 0, %s57
      %s58 = sphi 0, %s55
      %s59 = sphi 0, %s58
      %s75 = sphi 0, %s59
      %s81 = sphi 0, %s83
      %s84 = sphi 0, %s81
      %s85 = sphi 0, %s84
      %s101 = sphi 0, %s85
      %s107 = sphi 0, %s109
      %s110 = sphi 0, %s107
      %s111 = sphi 0, %s110
      %s127 = sphi 0, %s111
      %s133 = sphi 0, %s135
      %s136 = sphi 0, %s133
      %s137 = sphi 0, %s136
      %s153 = sphi 0, %s137
      %s159 = sphi 0, %s161
      %s162 = sphi 0, %s159
      %s163 = sphi 0, %s162
      %s179 = sphi 0, %s163
      %s185 = sphi 0, %s187
      %s188 = sphi 0, %s185
      %s189 = sphi 0, %s188
      %s205 = sphi 0, %s189
      %s211 = sphi 0, %s213
      %s214 = sphi 0, %s211
      %s215 = sphi 0, %s214
      %s231 = sphi 0, %s215
      %s237 = sphi 0, %s239
      %s240 = sphi 0, %s237
      %s241 = sphi 0, %s240
      %s257 = sphi 0, %s241
      %s263 = sphi 0, %s265
      %s266 = sphi 0, %s263
      %s267 = sphi 0, %s266
      %s283 = sphi 0, %s267
      %s289 = sphi 0, %s291
      %s292 = sphi 0, %s289
      %s293 = sphi 0, %s292
      %s309 = sphi 0, %s293
      %s315 = sphi 0, %s317
      %s318 = sphi 0, %s315
      %s319 = sphi 0, %s318
      %s335 = sphi 0, %s319
      %s339 = sphi 0, %s339
      %s341 = sphi 0, %s339
      %s342 = sphi 0, %s341
      %s356 = sphi 0, %s342
      %s360 = sphi 0, %s360
      %s362 = sphi 0, %s360
      %s363 = sphi 0, %s362
      %s377 = sphi 0, %s363
      %s381 = sphi 0, %s381
      %s383 = sphi 0, %s381
      %s384 = sphi 0, %s383
      %s398 = sphi 0, %s384
    $region4: #{tpu_custom_call.1} parent=1 // loop_header_branch
      %27 = sbr.rel (%p25) target = $region8
    $region5: #{tpu_custom_call.1} parent=1 // loop_body
      %s29 = ssub.s32 %s24, 1
      %s30 = ssub.s32 %s24, 2
      %s31 = sadd.s32 %s24, 1
      %s33 = sadd.s32 %s32, 1
      %p36 = scmp.eq.s32.totalorder %s24, 1
      %p37 = scmp.ne.s32.totalorder %s32, %s34
      %p38 = scmp.eq.s32.totalorder %s24, 0
      %p39 = por %p37, %p38
      %p40 = scmp.ne.s32.totalorder %s32, %s34
      %p41 = scmp.eq.s32.totalorder %s29, 1
      %p42 = por %p40, %p41
      %p43 = scmp.ne.s32.totalorder %s34, %s35
      %p44 = scmp.eq.s32.totalorder %s29, 0
      %p45 = por %p43, %p44
      %p46 = scmp.ne.s32.totalorder %s34, %s35
      %p47 = scmp.eq.s32.totalorder %s30, 1
      %p48 = por %p46, %p47
      %p50 = scmp.ne.s32.totalorder %s35, %s49
      %p51 = scmp.eq.s32.totalorder %s30, 0
      %p52 = por %p50, %p51
      %s53 = ssub.s32 %s24, %s31
      %p54 = scmp.eq.s32.totalorder %s53, 0
      %s56 = sadd.s32 %s55, 1
      %s57 = scalar_select %p54, %s55, %s56
      %p60 = pneg %p54
      %p61 = scmp.eq.s32.totalorder %s24, 1
      %p62 = por %p60, %p61
      %p63 = scmp.ne.s32.totalorder %s55, %s58
      %p64 = scmp.eq.s32.totalorder %s24, 0
      %p65 = por %p63, %p64
      %p66 = scmp.ne.s32.totalorder %s55, %s58
      %p67 = scmp.eq.s32.totalorder %s29, 1
      %p68 = por %p66, %p67
      %p69 = scmp.ne.s32.totalorder %s58, %s59
      %p70 = scmp.eq.s32.totalorder %s29, 0
      %p71 = por %p69, %p70
      %p72 = scmp.ne.s32.totalorder %s58, %s59
      %p73 = scmp.eq.s32.totalorder %s30, 1
      %p74 = por %p72, %p73
      %p76 = scmp.ne.s32.totalorder %s59, %s75
      %p77 = scmp.eq.s32.totalorder %s30, 0
      %p78 = por %p76, %p77
      %s79 = ssub.s32 %s24, %s31
      %p80 = scmp.eq.s32.totalorder %s79, 0
      %s82 = sadd.s32 %s81, 1
      %s83 = scalar_select %p80, %s81, %s82
      %p86 = pneg %p80
      %p87 = scmp.eq.s32.totalorder %s24, 1
      %p88 = por %p86, %p87
      %p89 = scmp.ne.s32.totalorder %s81, %s84
      %p90 = scmp.eq.s32.totalorder %s24, 0
      %p91 = por %p89, %p90
      %p92 = scmp.ne.s32.totalorder %s81, %s84
      %p93 = scmp.eq.s32.totalorder %s29, 1
      %p94 = por %p92, %p93
      %p95 = scmp.ne.s32.totalorder %s84, %s85
      %p96 = scmp.eq.s32.totalorder %s29, 0
      %p97 = por %p95, %p96
      %p98 = scmp.ne.s32.totalorder %s84, %s85
      %p99 = scmp.eq.s32.totalorder %s30, 1
      %p100 = por %p98, %p99
      %p102 = scmp.ne.s32.totalorder %s85, %s101
      %p103 = scmp.eq.s32.totalorder %s30, 0
      %p104 = por %p102, %p103
      %s105 = ssub.s32 %s24, %s31
      %p106 = scmp.eq.s32.totalorder %s105, 0
      %s108 = sadd.s32 %s107, 1
      %s109 = scalar_select %p106, %s107, %s108
      %p112 = pneg %p106
      %p113 = scmp.eq.s32.totalorder %s24, 1
      %p114 = por %p112, %p113
      %p115 = scmp.ne.s32.totalorder %s107, %s110
      %p116 = scmp.eq.s32.totalorder %s24, 0
      %p117 = por %p115, %p116
      %p118 = scmp.ne.s32.totalorder %s107, %s110
      %p119 = scmp.eq.s32.totalorder %s29, 1
      %p120 = por %p118, %p119
      %p121 = scmp.ne.s32.totalorder %s110, %s111
      %p122 = scmp.eq.s32.totalorder %s29, 0
      %p123 = por %p121, %p122
      %p124 = scmp.ne.s32.totalorder %s110, %s111
      %p125 = scmp.eq.s32.totalorder %s30, 1
      %p126 = por %p124, %p125
      %p128 = scmp.ne.s32.totalorder %s111, %s127
      %p129 = scmp.eq.s32.totalorder %s30, 0
      %p130 = por %p128, %p129
      %s131 = ssub.s32 %s24, %s31
      %p132 = scmp.eq.s32.totalorder %s131, 0
      %s134 = sadd.s32 %s133, 1
      %s135 = scalar_select %p132, %s133, %s134
      %p138 = pneg %p132
      %p139 = scmp.eq.s32.totalorder %s24, 1
      %p140 = por %p138, %p139
      %p141 = scmp.ne.s32.totalorder %s133, %s136
      %p142 = scmp.eq.s32.totalorder %s24, 0
      %p143 = por %p141, %p142
      %p144 = scmp.ne.s32.totalorder %s133, %s136
      %p145 = scmp.eq.s32.totalorder %s29, 1
      %p146 = por %p144, %p145
      %p147 = scmp.ne.s32.totalorder %s136, %s137
      %p148 = scmp.eq.s32.totalorder %s29, 0
      %p149 = por %p147, %p148
      %p150 = scmp.ne.s32.totalorder %s136, %s137
      %p151 = scmp.eq.s32.totalorder %s30, 1
      %p152 = por %p150, %p151
      %p154 = scmp.ne.s32.totalorder %s137, %s153
      %p155 = scmp.eq.s32.totalorder %s30, 0
      %p156 = por %p154, %p155
      %s157 = ssub.s32 %s24, %s31
      %p158 = scmp.eq.s32.totalorder %s157, 0
      %s160 = sadd.s32 %s159, 1
      %s161 = scalar_select %p158, %s159, %s160
      %p164 = pneg %p158
      %p165 = scmp.eq.s32.totalorder %s24, 1
      %p166 = por %p164, %p165
      %p167 = scmp.ne.s32.totalorder %s159, %s162
      %p168 = scmp.eq.s32.totalorder %s24, 0
      %p169 = por %p167, %p168
      %p170 = scmp.ne.s32.totalorder %s159, %s162
      %p171 = scmp.eq.s32.totalorder %s29, 1
      %p172 = por %p170, %p171
      %p173 = scmp.ne.s32.totalorder %s162, %s163
      %p174 = scmp.eq.s32.totalorder %s29, 0
      %p175 = por %p173, %p174
      %p176 = scmp.ne.s32.totalorder %s162, %s163
      %p177 = scmp.eq.s32.totalorder %s30, 1
      %p178 = por %p176, %p177
      %p180 = scmp.ne.s32.totalorder %s163, %s179
      %p181 = scmp.eq.s32.totalorder %s30, 0
      %p182 = por %p180, %p181
      %s183 = ssub.s32 %s24, %s31
      %p184 = scmp.eq.s32.totalorder %s183, 0
      %s186 = sadd.s32 %s185, 1
      %s187 = scalar_select %p184, %s185, %s186
      %p190 = pneg %p184
      %p191 = scmp.eq.s32.totalorder %s24, 1
      %p192 = por %p190, %p191
      %p193 = scmp.ne.s32.totalorder %s185, %s188
      %p194 = scmp.eq.s32.totalorder %s24, 0
      %p195 = por %p193, %p194
      %p196 = scmp.ne.s32.totalorder %s185, %s188
      %p197 = scmp.eq.s32.totalorder %s29, 1
      %p198 = por %p196, %p197
      %p199 = scmp.ne.s32.totalorder %s188, %s189
      %p200 = scmp.eq.s32.totalorder %s29, 0
      %p201 = por %p199, %p200
      %p202 = scmp.ne.s32.totalorder %s188, %s189
      %p203 = scmp.eq.s32.totalorder %s30, 1
      %p204 = por %p202, %p203
      %p206 = scmp.ne.s32.totalorder %s189, %s205
      %p207 = scmp.eq.s32.totalorder %s30, 0
      %p208 = por %p206, %p207
      %s209 = ssub.s32 %s24, %s31
      %p210 = scmp.eq.s32.totalorder %s209, 0
      %s212 = sadd.s32 %s211, 1
      %s213 = scalar_select %p210, %s211, %s212
      %p216 = pneg %p210
      %p217 = scmp.eq.s32.totalorder %s24, 1
      %p218 = por %p216, %p217
      %p219 = scmp.ne.s32.totalorder %s211, %s214
      %p220 = scmp.eq.s32.totalorder %s24, 0
      %p221 = por %p219, %p220
      %p222 = scmp.ne.s32.totalorder %s211, %s214
      %p223 = scmp.eq.s32.totalorder %s29, 1
      %p224 = por %p222, %p223
      %p225 = scmp.ne.s32.totalorder %s214, %s215
      %p226 = scmp.eq.s32.totalorder %s29, 0
      %p227 = por %p225, %p226
      %p228 = scmp.ne.s32.totalorder %s214, %s215
      %p229 = scmp.eq.s32.totalorder %s30, 1
      %p230 = por %p228, %p229
      %p232 = scmp.ne.s32.totalorder %s215, %s231
      %p233 = scmp.eq.s32.totalorder %s30, 0
      %p234 = por %p232, %p233
      %s235 = ssub.s32 %s24, %s31
      %p236 = scmp.eq.s32.totalorder %s235, 0
      %s238 = sadd.s32 %s237, 1
      %s239 = scalar_select %p236, %s237, %s238
      %p242 = pneg %p236
      %p243 = scmp.eq.s32.totalorder %s24, 1
      %p244 = por %p242, %p243
      %p245 = scmp.ne.s32.totalorder %s237, %s240
      %p246 = scmp.eq.s32.totalorder %s24, 0
      %p247 = por %p245, %p246
      %p248 = scmp.ne.s32.totalorder %s237, %s240
      %p249 = scmp.eq.s32.totalorder %s29, 1
      %p250 = por %p248, %p249
      %p251 = scmp.ne.s32.totalorder %s240, %s241
      %p252 = scmp.eq.s32.totalorder %s29, 0
      %p253 = por %p251, %p252
      %p254 = scmp.ne.s32.totalorder %s240, %s241
      %p255 = scmp.eq.s32.totalorder %s30, 1
      %p256 = por %p254, %p255
      %p258 = scmp.ne.s32.totalorder %s241, %s257
      %p259 = scmp.eq.s32.totalorder %s30, 0
      %p260 = por %p258, %p259
      %s261 = ssub.s32 %s24, %s31
      %p262 = scmp.eq.s32.totalorder %s261, 0
      %s264 = sadd.s32 %s263, 1
      %s265 = scalar_select %p262, %s263, %s264
      %p268 = pneg %p262
      %p269 = scmp.eq.s32.totalorder %s24, 1
      %p270 = por %p268, %p269
      %p271 = scmp.ne.s32.totalorder %s263, %s266
      %p272 = scmp.eq.s32.totalorder %s24, 0
      %p273 = por %p271, %p272
      %p274 = scmp.ne.s32.totalorder %s263, %s266
      %p275 = scmp.eq.s32.totalorder %s29, 1
      %p276 = por %p274, %p275
      %p277 = scmp.ne.s32.totalorder %s266, %s267
      %p278 = scmp.eq.s32.totalorder %s29, 0
      %p279 = por %p277, %p278
      %p280 = scmp.ne.s32.totalorder %s266, %s267
      %p281 = scmp.eq.s32.totalorder %s30, 1
      %p282 = por %p280, %p281
      %p284 = scmp.ne.s32.totalorder %s267, %s283
      %p285 = scmp.eq.s32.totalorder %s30, 0
      %p286 = por %p284, %p285
      %s287 = ssub.s32 %s24, %s31
      %p288 = scmp.eq.s32.totalorder %s287, 0
      %s290 = sadd.s32 %s289, 1
      %s291 = scalar_select %p288, %s289, %s290
      %p294 = pneg %p288
      %p295 = scmp.eq.s32.totalorder %s24, 1
      %p296 = por %p294, %p295
      %p297 = scmp.ne.s32.totalorder %s289, %s292
      %p298 = scmp.eq.s32.totalorder %s24, 0
      %p299 = por %p297, %p298
      %p300 = scmp.ne.s32.totalorder %s289, %s292
      %p301 = scmp.eq.s32.totalorder %s29, 1
      %p302 = por %p300, %p301
      %p303 = scmp.ne.s32.totalorder %s292, %s293
      %p304 = scmp.eq.s32.totalorder %s29, 0
      %p305 = por %p303, %p304
      %p306 = scmp.ne.s32.totalorder %s292, %s293
      %p307 = scmp.eq.s32.totalorder %s30, 1
      %p308 = por %p306, %p307
      %p310 = scmp.ne.s32.totalorder %s293, %s309
      %p311 = scmp.eq.s32.totalorder %s30, 0
      %p312 = por %p310, %p311
      %s313 = ssub.s32 %s24, %s31
      %p314 = scmp.eq.s32.totalorder %s313, 0
      %s316 = sadd.s32 %s315, 1
      %s317 = scalar_select %p314, %s315, %s316
      %p320 = pneg %p314
      %p321 = scmp.eq.s32.totalorder %s24, 1
      %p322 = por %p320, %p321
      %p323 = scmp.ne.s32.totalorder %s315, %s318
      %p324 = scmp.eq.s32.totalorder %s24, 0
      %p325 = por %p323, %p324
      %p326 = scmp.ne.s32.totalorder %s315, %s318
      %p327 = scmp.eq.s32.totalorder %s29, 1
      %p328 = por %p326, %p327
      %p329 = scmp.ne.s32.totalorder %s318, %s319
      %p330 = scmp.eq.s32.totalorder %s29, 0
      %p331 = por %p329, %p330
      %p332 = scmp.ne.s32.totalorder %s318, %s319
      %p333 = scmp.eq.s32.totalorder %s30, 1
      %p334 = por %p332, %p333
      %p336 = scmp.ne.s32.totalorder %s319, %s335
      %p337 = scmp.eq.s32.totalorder %s30, 0
      %p338 = por %p336, %p337
      %s340 = sadd.s32 %s339, 1
      %p343 = scmp.eq.s32.totalorder %s24, 1
      %p344 = scmp.ne.s32.totalorder %s339, %s341
      %p345 = scmp.eq.s32.totalorder %s24, 0
      %p346 = por %p344, %p345
      %p347 = scmp.ne.s32.totalorder %s339, %s341
      %p348 = scmp.eq.s32.totalorder %s29, 1
      %p349 = por %p347, %p348
      %p350 = scmp.ne.s32.totalorder %s341, %s342
      %p351 = scmp.eq.s32.totalorder %s29, 0
      %p352 = por %p350, %p351
      %p353 = scmp.ne.s32.totalorder %s341, %s342
      %p354 = scmp.eq.s32.totalorder %s30, 1
      %p355 = por %p353, %p354
      %p357 = scmp.ne.s32.totalorder %s342, %s356
      %p358 = scmp.eq.s32.totalorder %s30, 0
      %p359 = por %p357, %p358
      %s361 = sadd.s32 %s360, 1
      %p364 = scmp.eq.s32.totalorder %s24, 1
      %p365 = scmp.ne.s32.totalorder %s360, %s362
      %p366 = scmp.eq.s32.totalorder %s24, 0
      %p367 = por %p365, %p366
      %p368 = scmp.ne.s32.totalorder %s360, %s362
      %p369 = scmp.eq.s32.totalorder %s29, 1
      %p370 = por %p368, %p369
      %p371 = scmp.ne.s32.totalorder %s362, %s363
      %p372 = scmp.eq.s32.totalorder %s29, 0
      %p373 = por %p371, %p372
      %p374 = scmp.ne.s32.totalorder %s362, %s363
      %p375 = scmp.eq.s32.totalorder %s30, 1
      %p376 = por %p374, %p375
      %p378 = scmp.ne.s32.totalorder %s363, %s377
      %p379 = scmp.eq.s32.totalorder %s30, 0
      %p380 = por %p378, %p379
      %s382 = sadd.s32 %s381, 1
      %p385 = scmp.eq.s32.totalorder %s24, 1
      %p386 = scmp.ne.s32.totalorder %s381, %s383
      %p387 = scmp.eq.s32.totalorder %s24, 0
      %p388 = por %p386, %p387
      %p389 = scmp.ne.s32.totalorder %s381, %s383
      %p390 = scmp.eq.s32.totalorder %s29, 1
      %p391 = por %p389, %p390
      %p392 = scmp.ne.s32.totalorder %s383, %s384
      %p393 = scmp.eq.s32.totalorder %s29, 0
      %p394 = por %p392, %p393
      %p395 = scmp.ne.s32.totalorder %s383, %s384
      %p396 = scmp.eq.s32.totalorder %s30, 1
      %p397 = por %p395, %p396
      %p399 = scmp.ne.s32.totalorder %s384, %s398
      %p400 = scmp.eq.s32.totalorder %s30, 0
      %p401 = por %p399, %p400
      %p402 = scmp.le.s32.totalorder 1, %s24
      %p403 = scmp.lt.s32.totalorder %s24, 3
      %p404 = pnand %p402, %p403
      %p405 = pneg %p404
      // Predicated region
      $region9: #{tpu_custom_call.1} parent=5 // pred_check
        _
      $region10: #{tpu_custom_call.1} parent=5 // pred_check_branch
        %407 = sbr.rel (%p404) target = $region12
      $region11: #{tpu_custom_call.1} parent=5 // pred_region
        %s408 = ssub.s32 %s24, 1
        // Predicated region
        $region13: #{tpu_custom_call.1} parent=11 // pred_check
          %p409 = pneg %p45
        $region14: #{tpu_custom_call.1} parent=11 // pred_check_branch
          %411 = sbr.rel (%p409) target = $region16
        $region15: #{tpu_custom_call.1} parent=11 // pred_region
          _
        $region16: #{tpu_custom_call.1} parent=11 // pred_fallthru
          _
        // Predicated region
        $region17: #{tpu_custom_call.1} parent=11 // pred_check
          %p412 = pneg %p352
        $region18: #{tpu_custom_call.1} parent=11 // pred_check_branch
          %414 = sbr.rel (%p412) target = $region20
        $region19: #{tpu_custom_call.1} parent=11 // pred_region
          _
        $region20: #{tpu_custom_call.1} parent=11 // pred_fallthru
          _
        // Predicated region
        $region21: #{tpu_custom_call.1} parent=11 // pred_check
          %p415 = pneg %p373
        $region22: #{tpu_custom_call.1} parent=11 // pred_check_branch
          %417 = sbr.rel (%p415) target = $region24
        $region23: #{tpu_custom_call.1} parent=11 // pred_region
          _
        $region24: #{tpu_custom_call.1} parent=11 // pred_fallthru
          _
      $region12: #{tpu_custom_call.1} parent=5 // pred_fallthru
        _
      %p418 = scmp.lt.s32.totalorder %s24, 2
      // Predicated region
      $region25: #{tpu_custom_call.1} parent=5 // pred_check
        %p419 = pneg %p418
      $region26: #{tpu_custom_call.1} parent=5 // pred_check_branch
        %421 = sbr.rel (%p419) target = $region28
      $region27: #{tpu_custom_call.1} parent=5 // pred_region
        // Predicated region
        $region29: #{tpu_custom_call.1} parent=27 // pred_check
          %p422 = pneg %p65
        $region30: #{tpu_custom_call.1} parent=27 // pred_check_branch
          %424 = sbr.rel (%p422) target = $region32
        $region31: #{tpu_custom_call.1} parent=27 // pred_region
          %p425 = scmp.lt.s32.totalorder %s24, 1
          %s426 = scalar_select %p425, %s24, 1
          %s427 = scalar_lea.vmem %s1, %s426
        $region32: #{tpu_custom_call.1} parent=27 // pred_fallthru
          _
        // Predicated region
        $region33: #{tpu_custom_call.1} parent=27 // pred_check
          %p428 = pneg %p91
        $region34: #{tpu_custom_call.1} parent=27 // pred_check_branch
          %430 = sbr.rel (%p428) target = $region36
        $region35: #{tpu_custom_call.1} parent=27 // pred_region
          %p431 = scmp.lt.s32.totalorder %s24, 1
          %s432 = scalar_select %p431, %s24, 1
          %s433 = scalar_lea.vmem %s2, %s432
        $region36: #{tpu_custom_call.1} parent=27 // pred_fallthru
          _
        // Predicated region
        $region37: #{tpu_custom_call.1} parent=27 // pred_check
          %p434 = pneg %p117
        $region38: #{tpu_custom_call.1} parent=27 // pred_check_branch
          %436 = sbr.rel (%p434) target = $region40
        $region39: #{tpu_custom_call.1} parent=27 // pred_region
          %p437 = scmp.lt.s32.totalorder %s24, 1
          %s438 = scalar_select %p437, %s24, 1
          %s439 = smul.addr %s438, 16
          %s440 = smul.addr %s439, 4
          %s441 = scalar_lea.vmem %s3, %s440
        $region40: #{tpu_custom_call.1} parent=27 // pred_fallthru
          _
        // Predicated region
        $region41: #{tpu_custom_call.1} parent=27 // pred_check
          %p442 = pneg %p143
        $region42: #{tpu_custom_call.1} parent=27 // pred_check_branch
          %444 = sbr.rel (%p442) target = $region44
        $region43: #{tpu_custom_call.1} parent=27 // pred_region
          %p445 = scmp.lt.s32.totalorder %s24, 1
          %s446 = scalar_select %p445, %s24, 1
          %s447 = smul.addr %s446, 4
          %s448 = smul.addr %s447, 4
          %s449 = scalar_lea.vmem %s4, %s448
        $region44: #{tpu_custom_call.1} parent=27 // pred_fallthru
          _
        // Predicated region
        $region45: #{tpu_custom_call.1} parent=27 // pred_check
          %p450 = pneg %p169
        $region46: #{tpu_custom_call.1} parent=27 // pred_check_branch
          %452 = sbr.rel (%p450) target = $region48
        $region47: #{tpu_custom_call.1} parent=27 // pred_region
          %p453 = scmp.lt.s32.totalorder %s24, 1
          %s454 = scalar_select %p453, %s24, 1
          %s455 = scalar_lea.vmem %s5, %s454
        $region48: #{tpu_custom_call.1} parent=27 // pred_fallthru
          _
        // Predicated region
        $region49: #{tpu_custom_call.1} parent=27 // pred_check
          %p456 = pneg %p195
        $region50: #{tpu_custom_call.1} parent=27 // pred_check_branch
          %458 = sbr.rel (%p456) target = $region52
        $region51: #{tpu_custom_call.1} parent=27 // pred_region
          %p459 = scmp.lt.s32.totalorder %s24, 1
          %s460 = scalar_select %p459, %s24, 1
          %s461 = scalar_lea.vmem %s6, %s460
        $region52: #{tpu_custom_call.1} parent=27 // pred_fallthru
          _
        // Predicated region
        $region53: #{tpu_custom_call.1} parent=27 // pred_check
          %p462 = pneg %p221
        $region54: #{tpu_custom_call.1} parent=27 // pred_check_branch
          %464 = sbr.rel (%p462) target = $region56
        $region55: #{tpu_custom_call.1} parent=27 // pred_region
          %p465 = scmp.lt.s32.totalorder %s24, 1
          %s466 = scalar_select %p465, %s24, 1
          %s467 = scalar_lea.vmem %s7, %s466
        $region56: #{tpu_custom_call.1} parent=27 // pred_fallthru
          _
        // Predicated region
        $region57: #{tpu_custom_call.1} parent=27 // pred_check
          %p468 = pneg %p247
        $region58: #{tpu_custom_call.1} parent=27 // pred_check_branch
          %470 = sbr.rel (%p468) target = $region60
        $region59: #{tpu_custom_call.1} parent=27 // pred_region
          %p471 = scmp.lt.s32.totalorder %s24, 1
          %s472 = scalar_select %p471, %s24, 1
          %s473 = smul.addr %s472, 16
          %s474 = smul.addr %s473, 4
          %s475 = scalar_lea.vmem %s8, %s474
        $region60: #{tpu_custom_call.1} parent=27 // pred_fallthru
          _
        // Predicated region
        $region61: #{tpu_custom_call.1} parent=27 // pred_check
          %p476 = pneg %p273
        $region62: #{tpu_custom_call.1} parent=27 // pred_check_branch
          %478 = sbr.rel (%p476) target = $region64
        $region63: #{tpu_custom_call.1} parent=27 // pred_region
          %p479 = scmp.lt.s32.totalorder %s24, 1
          %s480 = scalar_select %p479, %s24, 1
          %s481 = scalar_lea.vmem %s9, %s480
        $region64: #{tpu_custom_call.1} parent=27 // pred_fallthru
          _
        // Predicated region
        $region65: #{tpu_custom_call.1} parent=27 // pred_check
          %p482 = pneg %p299
        $region66: #{tpu_custom_call.1} parent=27 // pred_check_branch
          %484 = sbr.rel (%p482) target = $region68
        $region67: #{tpu_custom_call.1} parent=27 // pred_region
          %s485 = sand.u32 %s289, 1
          %s486 = scalar_lea.sflag [#allocation4], %s485
          %s487 = sand.u32 %s289, 1
          %s488 = smul.addr %s487, 64
          %s489 = scalar_lea.vmem [#allocation3], %s488
          %s491 = ssub.s32 1024, 1024
          %492 = vsyncadd %s486, %s491
          %s493 = smul.addr %s24, 16
          %s494 = smul.addr %s493, 64
          %s495 = scalar_lea.hbm %s10, %s494
          %s496 = sshll.u32 %s489, 4
          %s497 = int_to_ptr.vmem [resolvable:$true] %s496
          %502 = dma.hbm_to_vmem [thread:$0]  %s495, 1024, %s497, %s486, 64, 64, 4
        $region68: #{tpu_custom_call.1} parent=27 // pred_fallthru
          _
        // Predicated region
        $region69: #{tpu_custom_call.1} parent=27 // pred_check
          %p503 = pneg %p325
        $region70: #{tpu_custom_call.1} parent=27 // pred_check_branch
          %505 = sbr.rel (%p503) target = $region72
        $region71: #{tpu_custom_call.1} parent=27 // pred_region
          %p506 = scmp.lt.s32.totalorder %s24, 1
          %s507 = scalar_select %p506, %s24, 1
          %s508 = scalar_lea.vmem %s11, %s507
        $region72: #{tpu_custom_call.1} parent=27 // pred_fallthru
          _
      $region28: #{tpu_custom_call.1} parent=5 // pred_fallthru
        _
      %p509 = scmp.le.s32.totalorder 1, %s24
      %p510 = scmp.lt.s32.totalorder %s24, 3
      %p511 = pnand %p509, %p510
      %p512 = pneg %p511
      // Predicated region
      $region73: #{tpu_custom_call.1} parent=5 // pred_check
        _
      $region74: #{tpu_custom_call.1} parent=5 // pred_check_branch
        %514 = sbr.rel (%p511) target = $region76
      $region75: #{tpu_custom_call.1} parent=5 // pred_region
        %s515 = ssub.s32 %s24, 1
        %s516 = sand.u32 %s292, 1
        %s517 = scalar_lea.sflag [#allocation4], %s516
        %s518 = sand.u32 %s292, 1
        %s519 = smul.addr %s518, 64
        %s520 = scalar_lea.vmem [#allocation3], %s519
        // Predicated region
        $region77: #{tpu_custom_call.1} parent=75 // pred_check
          %p521 = pneg %p305
        $region78: #{tpu_custom_call.1} parent=75 // pred_check_branch
          %523 = sbr.rel (%p521) target = $region80
        $region79: #{tpu_custom_call.1} parent=75 // pred_region
          %524 = dma.done %s517, 1024
        $region80: #{tpu_custom_call.1} parent=75 // pred_fallthru
          _
        %p525 = pneg %p45
        %p526 = pneg %p42
        %p527 = scmp.lt.s32.totalorder %s29, 1
        %s528 = scalar_select %p527, %s29, 1
        %s529 = scalar_lea.vmem %s1, %s528
        %p530 = pneg %p71
        %p531 = pneg %p68
        %p532 = scmp.lt.s32.totalorder %s29, 1
        %s533 = scalar_select %p532, %s29, 1
        %s534 = scalar_lea.vmem %s2, %s533
        %p535 = pneg %p97
        %p536 = pneg %p94
        %p537 = scmp.lt.s32.totalorder %s29, 1
        %s538 = scalar_select %p537, %s29, 1
        %s539 = smul.addr %s538, 16
        %s540 = smul.addr %s539, 4
        %s541 = scalar_lea.vmem %s3, %s540
        %p542 = pneg %p123
        %p543 = pneg %p120
        %p544 = scmp.lt.s32.totalorder %s29, 1
        %s545 = scalar_select %p544, %s29, 1
        %s546 = smul.addr %s545, 4
        %s547 = smul.addr %s546, 4
        %s548 = scalar_lea.vmem %s4, %s547
        %p549 = pneg %p149
        %p550 = pneg %p146
        %p551 = scmp.lt.s32.totalorder %s29, 1
        %s552 = scalar_select %p551, %s29, 1
        %s553 = scalar_lea.vmem %s5, %s552
        %p554 = pneg %p175
        %p555 = pneg %p172
        %p556 = scmp.lt.s32.totalorder %s29, 1
        %s557 = scalar_select %p556, %s29, 1
        %s558 = scalar_lea.vmem %s6, %s557
        %p559 = pneg %p201
        %p560 = pneg %p198
        %p561 = scmp.lt.s32.totalorder %s29, 1
        %s562 = scalar_select %p561, %s29, 1
        %s563 = scalar_lea.vmem %s7, %s562
        %p564 = pneg %p227
        %p565 = pneg %p224
        %p566 = scmp.lt.s32.totalorder %s29, 1
        %s567 = scalar_select %p566, %s29, 1
        %s568 = smul.addr %s567, 16
        %s569 = smul.addr %s568, 4
        %s570 = scalar_lea.vmem %s8, %s569
        %p571 = pneg %p253
        %p572 = pneg %p250
        %p573 = scmp.lt.s32.totalorder %s29, 1
        %s574 = scalar_select %p573, %s29, 1
        %s575 = scalar_lea.vmem %s9, %s574
        %p576 = pneg %p279
        %p577 = pneg %p276
        %s578 = sand.u32 %s292, 1
        %s579 = scalar_lea.sflag [#allocation4], %s578
        %s580 = sand.u32 %s292, 1
        %s581 = smul.addr %s580, 64
        %s582 = scalar_lea.vmem [#allocation3], %s581
        %p583 = pneg %p305
        %p584 = pneg %p302
        %p585 = scmp.lt.s32.totalorder %s29, 1
        %s586 = scalar_select %p585, %s29, 1
        %s587 = scalar_lea.vmem %s11, %s586
        %p588 = pneg %p331
        %p589 = pneg %p328
        %p590 = pneg %p352
        %p591 = pneg %p349
        %p592 = pneg %p373
        %p593 = pneg %p370
        %p594 = pneg %p394
        %p595 = pneg %p391
        %p596 = scmp.lt.s32.totalorder %s29, 1
        %s597 = scalar_select %p596, %s29, 1
        %s598 = scalar_lea.vmem %s1, %s597
        %p599 = scmp.lt.s32.totalorder %s29, 1
        %s600 = scalar_select %p599, %s29, 1
        %s601 = scalar_lea.vmem %s2, %s600
        %p602 = scmp.lt.s32.totalorder %s29, 1
        %s603 = scalar_select %p602, %s29, 1
        %s604 = smul.addr %s603, 16
        %s605 = smul.addr %s604, 4
        %s606 = scalar_lea.vmem %s3, %s605
        %p607 = scmp.lt.s32.totalorder %s29, 1
        %s608 = scalar_select %p607, %s29, 1
        %s609 = smul.addr %s608, 4
        %s610 = smul.addr %s609, 4
        %s611 = scalar_lea.vmem %s4, %s610
        %p612 = scmp.lt.s32.totalorder %s29, 1
        %s613 = scalar_select %p612, %s29, 1
        %s614 = scalar_lea.vmem %s5, %s613
        %p615 = scmp.lt.s32.totalorder %s29, 1
        %s616 = scalar_select %p615, %s29, 1
        %s617 = scalar_lea.vmem %s6, %s616
        %p618 = scmp.lt.s32.totalorder %s29, 1
        %s619 = scalar_select %p618, %s29, 1
        %s620 = scalar_lea.vmem %s7, %s619
        %p621 = scmp.lt.s32.totalorder %s29, 1
        %s622 = scalar_select %p621, %s29, 1
        %s623 = smul.addr %s622, 16
        %s624 = smul.addr %s623, 4
        %s625 = scalar_lea.vmem %s8, %s624
        %p626 = scmp.lt.s32.totalorder %s29, 1
        %s627 = scalar_select %p626, %s29, 1
        %s628 = scalar_lea.vmem %s9, %s627
        %p629 = scmp.lt.s32.totalorder %s29, 1
        %s630 = scalar_select %p629, %s29, 1
        %s631 = scalar_lea.vmem %s11, %s630
        %p633 = scmp.eq.s32.totalorder %s29, 0
        // Predicated region
        $region81: #{tpu_custom_call.1} parent=75 // pred_check
          %p634 = pneg %p633
        $region82: #{tpu_custom_call.1} parent=75 // pred_check_branch
          %636 = sbr.rel (%p634) target = $region84
        $region83: #{tpu_custom_call.1} parent=75 // pred_region
          %v637 = vld [vmem:[%s0] sm:$0xff]
          %v638 = vld [vmem:[%s0 + $0x8] sm:$0xff]
          %639 = vst [vmem:[#allocation2] sm:$0xff] %v637
          %640 = vst [vmem:[#allocation2 + $0x8] sm:$0xff] %v638
        $region84: #{tpu_custom_call.1} parent=75 // pred_fallthru
          _
        %v641 = vld [vmem:[#allocation2] sm:$0xff]
        %v642 = vld [vmem:[#allocation2 + $0x8] sm:$0xff]
        %v643 = vlaneseq
        %v644 = vand.u32 %v643, 127
        %vm645 = vcmp.lt.s32.totalorder %v644, 32
        %v646 = vld [vmem:[%s598] sm:$0x1]
        %v647 = vld [vmem:[%s601] sm:$0x1]
        %648 = vadd.xlane.f32.xlu0 %v641
        %v649 = vpop.xlane.xlu0 %648
        %650 = vadd.xlane.f32.xlu0 %v642
        %v651 = vpop.xlane.xlu0 %650
        %v652 = vmul.f32 %v649, 0.03125
        %v653 = vmul.f32 %v651, 0.03125
        %v654 = vsub.f32 %v641, %v652
        %v655 = vsub.f32 %v642, %v653
        %v656 = vsel %vm645, 1, 0
        %vm657 = vcmp.eq.s32.totalorder %v656, 1
        %v658 = vsel %vm657, %v654, 0.0
        %v659 = vsel %vm657, %v655, 0.0
        %v660 = vmul.f32 %v658, %v658
        %v661 = vmul.f32 %v659, %v659
        %662 = vadd.xlane.f32.xlu0 %v660
        %v663 = vpop.xlane.xlu0 %662
        %664 = vadd.xlane.f32.xlu0 %v661
        %v665 = vpop.xlane.xlu0 %664
        %v666 = vmul.f32 %v663, 0.03125
        %v667 = vmul.f32 %v665, 0.03125
        %v668 = vadd.f32 %v666, 1e-05
        %v669 = vadd.f32 %v667, 1e-05
        %v670 = vrsqrt.pop %v668
        %v671 = vrsqrt.pop %v669
        %v672 = vmul.f32 %v658, %v670
        %v673 = vmul.f32 %v659, %v671
        %v675 = vlaneseq
        %v676 = vshrl.u32 %v675, 7
        %v677 = vsub.s32 0, %v676
        %v678 = vrot.slane %v646, %v677
        %v680 = vmul.f32 %v672, %v678
        %v681 = vmul.f32 %v673, %v678
        %v683 = vlaneseq
        %v684 = vshrl.u32 %v683, 7
        %v685 = vsub.s32 0, %v684
        %v686 = vrot.slane %v647, %v685
        %v688 = vadd.f32 %v680, %v686
        %v689 = vadd.f32 %v681, %v686
        %v690 = vpack.c.bf16 %v689, %v688
        %v691 = vld [vmem:[%s606] sm:$0xf]
        %v692 = vld [vmem:[%s606 + $0x4] sm:$0xf]
        %v693 = vld [vmem:[%s606 + $0x8] sm:$0xf]
        %v694 = vld [vmem:[%s606 + $0xc] sm:$0xf]
        %v695 = vld [vmem:[%s606 + $0x10] sm:$0xf]
        %v696 = vld [vmem:[%s606 + $0x14] sm:$0xf]
        %v697 = vld [vmem:[%s606 + $0x18] sm:$0xf]
        %v698 = vld [vmem:[%s606 + $0x1c] sm:$0xf]
        %v699 = vld [vmem:[%s606 + $0x20] sm:$0xf]
        %v700 = vld [vmem:[%s606 + $0x24] sm:$0xf]
        %v701 = vld [vmem:[%s606 + $0x28] sm:$0xf]
        %v702 = vld [vmem:[%s606 + $0x2c] sm:$0xf]
        %v703 = vld [vmem:[%s606 + $0x30] sm:$0xf]
        %v704 = vld [vmem:[%s606 + $0x34] sm:$0xf]
        %v705 = vld [vmem:[%s606 + $0x38] sm:$0xf]
        %v706 = vld [vmem:[%s606 + $0x3c] sm:$0xf]
        %v723 = vunpack.c.l.b16 %v691
        %v724 = vunpack.c.l.b16 %v692
        %v725 = vunpack.c.l.b16 %v693
        %v726 = vunpack.c.l.b16 %v694
        %v727 = vunpack.c.l.b16 %v695
        %v728 = vunpack.c.l.b16 %v696
        %v729 = vunpack.c.l.b16 %v697
        %v730 = vunpack.c.l.b16 %v698
        %v731 = vunpack.c.l.b16 %v699
        %v732 = vunpack.c.l.b16 %v700
        %v733 = vunpack.c.l.b16 %v701
        %v734 = vunpack.c.l.b16 %v702
        %v735 = vunpack.c.l.b16 %v703
        %v736 = vunpack.c.l.b16 %v704
        %v737 = vunpack.c.l.b16 %v705
        %v738 = vunpack.c.l.b16 %v706
        %v739 = vpack.c.b16 %v724, %v723
        %v740 = vpack.c.b16 %v726, %v725
        %v741 = vpack.c.b16 %v728, %v727
        %v742 = vpack.c.b16 %v730, %v729
        %v743 = vpack.c.b16 %v732, %v731
        %v744 = vpack.c.b16 %v734, %v733
        %v745 = vpack.c.b16 %v736, %v735
        %v746 = vpack.c.b16 %v738, %v737
        %755 = vmatprep.subr.bf16.mxu0 0
        %756 = vmatpush1.bf16.msra.mxu0 %v746
        %757 = vmatprep.subr.bf16.mxu0 0
        %758 = vmatpush1.bf16.msra.mxu0 %v745
        %759 = vmatprep.subr.bf16.mxu0 0
        %760 = vmatpush1.bf16.msra.mxu0 %v744
        %761 = vmatprep.subr.bf16.mxu0 0
        %762 = vmatpush1.bf16.msra.mxu0 %v743
        %763 = vmatprep.subr.bf16.mxu0 0
        %764 = vmatpush1.bf16.msra.mxu0 %v742
        %765 = vmatprep.subr.bf16.mxu0 0
        %766 = vmatpush1.bf16.msra.mxu0 %v741
        %767 = vmatprep.subr.bf16.mxu0 0
        %768 = vmatpush1.bf16.msra.mxu0 %v740
        %769 = vmatprep.subr.bf16.mxu0 0
        %770 = vmatpush1.bf16.msra.mxu0 %v739
        %771 = vmatprep.subr.bf16.mxu0 0
        %772 = vmatpush2.bf16.msra.mxu0 0
        %773 = vmatprep.subr.bf16.mxu0 0
        %774 = vmatpush2.bf16.msra.mxu0 0
        %775 = vmatprep.subr.bf16.mxu0 0
        %776 = vmatpush2.bf16.msra.mxu0 0
        %777 = vmatprep.subr.bf16.mxu0 0
        %778 = vmatpush2.bf16.msra.mxu0 0
        %779 = vmatprep.subr.bf16.mxu0 0
        %780 = vmatpush2.bf16.msra.mxu0 0
        %781 = vmatprep.subr.bf16.mxu0 0
        %782 = vmatpush2.bf16.msra.mxu0 0
        %783 = vmatprep.subr.bf16.mxu0 0
        %784 = vmatpush2.bf16.msra.mxu0 0
        %785 = vmatprep.subr.bf16.mxu0 0
        %786 = vmatpush2.bf16.msra.mxu0 0
        %787 = vmatprep.mubr.bf16.mxu0 0
        %788 = vmatmul.mubr.bf16.gmra.mxu0 %v690
        %v789 = vpop.f32.mrf.mxu0
        %v790 = vadd.f32 0.0, %v789
        %v791 = vpop.f32.mrf.mxu0
        %v792 = vpop.f32.mrf.mxu0
        %v793 = vadd.f32 0.0, %v792
        %v794 = vpop.f32.mrf.mxu0
        %795 = vdwg.mxu0
        %v796 = vpack.c.bf16 %v793, %v790
        %v797 = vlaneseq
        %v798 = vshrl.u32 %v797, 7
        %vm799 = vcmp.le.s32.totalorder %v644, %v798
        %v801 = vunpack.c.l.b16 %v796
        %v802 = vunpack.c.h.b16 %v796
        %v803 = vpack.c.b16 %v801, %v801
        %v804 = vpack.c.b16 %v802, %v802
        %805 = vrot.lane.b32.xlu0 %v803, 96
        %v806 = vpop.permute.xlu0 %805
        %vm807 = vcmask 64512
        %v809 = vsel %vm807, %v803, 0
        %v812 = vsel %vm807, %v806, 0
        %814 = vmatprep.subr.bf16.mxu0 0
        %815 = vmatpush1.bf16.xpose.msra.mxu0 0
        %816 = vmatprep.subr.bf16.mxu0 0
        %817 = vmatpush1.bf16.xpose.msra.mxu0 0
        %818 = vmatprep.subr.bf16.mxu0 0
        %819 = vmatpush1.bf16.xpose.msra.mxu0 0
        %820 = vmatprep.subr.bf16.mxu0 0
        %821 = vmatpush1.bf16.xpose.msra.mxu0 0
        %822 = vmatprep.subr.bf16.mxu0 0
        %823 = vmatpush1.bf16.xpose.msra.mxu0 0
        %824 = vmatprep.subr.bf16.mxu0 0
        %825 = vmatpush1.bf16.xpose.msra.mxu0 0
        %826 = vmatprep.subr.bf16.mxu0 0
        %827 = vmatpush1.bf16.xpose.msra.mxu0 0
        %828 = vmatprep.subr.bf16.mxu0 0
        %829 = vmatpush1.bf16.xpose.msra.mxu0 %v812
        %830 = vmatprep.subr.bf16.mxu0 0
        %831 = vmatpush2.bf16.xpose.msra.mxu0 0
        %832 = vmatprep.subr.bf16.mxu0 0
        %833 = vmatpush2.bf16.xpose.msra.mxu0 0
        %834 = vmatprep.subr.bf16.mxu0 0
        %835 = vmatpush2.bf16.xpose.msra.mxu0 0
        %836 = vmatprep.subr.bf16.mxu0 0
        %837 = vmatpush2.bf16.xpose.msra.mxu0 0
        %838 = vmatprep.subr.bf16.mxu0 0
        %839 = vmatpush2.bf16.xpose.msra.mxu0 0
        %840 = vmatprep.subr.bf16.mxu0 0
        %841 = vmatpush2.bf16.xpose.msra.mxu0 0
        %842 = vmatprep.subr.bf16.mxu0 0
        %843 = vmatpush2.bf16.xpose.msra.mxu0 0
        %844 = vmatprep.subr.bf16.mxu0 0
        %845 = vmatpush2.bf16.xpose.msra.mxu0 0
        %846 = vmatprep.mubr.bf16.mxu0 0
        %847 = vmatmul.mubr.bf16.gmra.mxu0 %v809
        %v848 = vpop.f32.mrf.mxu0
        %v849 = vadd.f32 0.0, %v848
        %v850 = vpop.f32.mrf.mxu0
        %v851 = vpop.f32.mrf.mxu0
        %v852 = vpop.f32.mrf.mxu0
        %853 = vdwg.mxu0
        %854 = vrot.lane.b32.xlu0 %v804, 96
        %v855 = vpop.permute.xlu0 %854
        %v857 = vsel %vm807, %v804, 0
        %v860 = vsel %vm807, %v855, 0
        %862 = vmatprep.subr.bf16.mxu0 0
        %863 = vmatpush1.bf16.xpose.msra.mxu0 0
        %864 = vmatprep.subr.bf16.mxu0 0
        %865 = vmatpush1.bf16.xpose.msra.mxu0 0
        %866 = vmatprep.subr.bf16.mxu0 0
        %867 = vmatpush1.bf16.xpose.msra.mxu0 0
        %868 = vmatprep.subr.bf16.mxu0 0
        %869 = vmatpush1.bf16.xpose.msra.mxu0 0
        %870 = vmatprep.subr.bf16.mxu0 0
        %871 = vmatpush1.bf16.xpose.msra.mxu0 0
        %872 = vmatprep.subr.bf16.mxu0 0
        %873 = vmatpush1.bf16.xpose.msra.mxu0 0
        %874 = vmatprep.subr.bf16.mxu0 0
        %875 = vmatpush1.bf16.xpose.msra.mxu0 0
        %876 = vmatprep.subr.bf16.mxu0 0
        %877 = vmatpush1.bf16.xpose.msra.mxu0 %v860
        %878 = vmatprep.subr.bf16.mxu0 0
        %879 = vmatpush2.bf16.xpose.msra.mxu0 0
        %880 = vmatprep.subr.bf16.mxu0 0
        %881 = vmatpush2.bf16.xpose.msra.mxu0 0
        %882 = vmatprep.subr.bf16.mxu0 0
        %883 = vmatpush2.bf16.xpose.msra.mxu0 0
        %884 = vmatprep.subr.bf16.mxu0 0
        %885 = vmatpush2.bf16.xpose.msra.mxu0 0
        %886 = vmatprep.subr.bf16.mxu0 0
        %887 = vmatpush2.bf16.xpose.msra.mxu0 0
        %888 = vmatprep.subr.bf16.mxu0 0
        %889 = vmatpush2.bf16.xpose.msra.mxu0 0
        %890 = vmatprep.subr.bf16.mxu0 0
        %891 = vmatpush2.bf16.xpose.msra.mxu0 0
        %892 = vmatprep.subr.bf16.mxu0 0
        %893 = vmatpush2.bf16.xpose.msra.mxu0 0
        %894 = vmatprep.mubr.bf16.mxu0 0
        %895 = vmatmul.mubr.bf16.gmra.mxu0 %v857
        %v896 = vpop.f32.mrf.mxu0
        %v897 = vadd.f32 0.0, %v896
        %v898 = vpop.f32.mrf.mxu0
        %v899 = vpop.f32.mrf.mxu0
        %v900 = vpop.f32.mrf.mxu0
        %901 = vdwg.mxu0
        %v902 = vsel %vm799, %v849, -1e+30
        %v903 = vsel %vm799, %v897, -1e+30
        %v904 = vsel %vm807, %v902, -inf
        %905 = vmax.xlane.f32.xlu0 %v904
        %v906 = vpop.xlane.xlu0 %905
        %v907 = vsel %vm807, %v903, -inf
        %908 = vmax.xlane.f32.xlu0 %v907
        %v909 = vpop.xlane.xlu0 %908
        %v910 = vsub.f32 %v902, %v906
        %v911 = vsub.f32 %v903, %v909
        %v912 = vmul.f32 %v910, 1.442695
        %v913 = vpow.pop %v912
        %v914 = vmul.f32 %v911, 1.442695
        %v915 = vpow.pop %v914
        %v916 = vsel %vm807, %v913, 0.0
        %917 = vadd.xlane.f32.xlu0 %v916
        %v918 = vpop.xlane.xlu0 %917
        %v919 = vsel %vm807, %v915, 0.0
        %920 = vadd.xlane.f32.xlu0 %v919
        %v921 = vpop.xlane.xlu0 %920
        %v922 = vrcp.pop %v918
        %v923 = vmul.f32 %v913, %v922
        %v924 = vrcp.pop %v921
        %v925 = vmul.f32 %v915, %v924
        %v926 = vpack.c.bf16 %v923, %v923
        %v927 = vpack.c.bf16 %v925, %v925
        %928 = vrot.lane.b32.xlu0 %v803, 64
        %v929 = vpop.permute.xlu0 %928
        %v931 = vsel %vm807, %v926, 0
        %vm933 = vcmask 1043456
        %v935 = vsel %vm933, %v929, 0
        %937 = vmatprep.subr.bf16.mxu0 0
        %938 = vmatpush1.bf16.msra.mxu0 0
        %939 = vmatprep.subr.bf16.mxu0 0
        %940 = vmatpush1.bf16.msra.mxu0 0
        %941 = vmatprep.subr.bf16.mxu0 0
        %942 = vmatpush1.bf16.msra.mxu0 0
        %943 = vmatprep.subr.bf16.mxu0 0
        %944 = vmatpush1.bf16.msra.mxu0 0
        %945 = vmatprep.subr.bf16.mxu0 0
        %946 = vmatpush1.bf16.msra.mxu0 0
        %947 = vmatprep.subr.bf16.mxu0 0
        %948 = vmatpush1.bf16.msra.mxu0 0
        %949 = vmatprep.subr.bf16.mxu0 0
        %950 = vmatpush1.bf16.msra.mxu0 0
        %951 = vmatprep.subr.bf16.mxu0 0
        %952 = vmatpush1.bf16.msra.mxu0 %v935
        %953 = vmatprep.subr.bf16.mxu0 0
        %954 = vmatpush2.bf16.msra.mxu0 0
        %955 = vmatprep.subr.bf16.mxu0 0
        %956 = vmatpush2.bf16.msra.mxu0 0
        %957 = vmatprep.subr.bf16.mxu0 0
        %958 = vmatpush2.bf16.msra.mxu0 0
        %959 = vmatprep.subr.bf16.mxu0 0
        %960 = vmatpush2.bf16.msra.mxu0 0
        %961 = vmatprep.subr.bf16.mxu0 0
        %962 = vmatpush2.bf16.msra.mxu0 0
        %963 = vmatprep.subr.bf16.mxu0 0
        %964 = vmatpush2.bf16.msra.mxu0 0
        %965 = vmatprep.subr.bf16.mxu0 0
        %966 = vmatpush2.bf16.msra.mxu0 0
        %967 = vmatprep.subr.bf16.mxu0 0
        %968 = vmatpush2.bf16.msra.mxu0 0
        %969 = vmatprep.mubr.bf16.mxu0 0
        %970 = vmatmul.mubr.bf16.gmra.mxu0 %v931
        %v971 = vpop.f32.mrf.mxu0
        %v972 = vadd.f32 0.0, %v971
        %v973 = vpop.f32.mrf.mxu0
        %v974 = vpop.f32.mrf.mxu0
        %v975 = vpop.f32.mrf.mxu0
        %976 = vdwg.mxu0
        %977 = vrot.lane.b32.xlu0 %v804, 64
        %v978 = vpop.permute.xlu0 %977
        %v980 = vsel %vm807, %v927, 0
        %v983 = vsel %vm933, %v978, 0
        %985 = vmatprep.subr.bf16.mxu0 0
        %986 = vmatpush1.bf16.msra.mxu0 0
        %987 = vmatprep.subr.bf16.mxu0 0
        %988 = vmatpush1.bf16.msra.mxu0 0
        %989 = vmatprep.subr.bf16.mxu0 0
        %990 = vmatpush1.bf16.msra.mxu0 0
        %991 = vmatprep.subr.bf16.mxu0 0
        %992 = vmatpush1.bf16.msra.mxu0 0
        %993 = vmatprep.subr.bf16.mxu0 0
        %994 = vmatpush1.bf16.msra.mxu0 0
        %995 = vmatprep.subr.bf16.mxu0 0
        %996 = vmatpush1.bf16.msra.mxu0 0
        %997 = vmatprep.subr.bf16.mxu0 0
        %998 = vmatpush1.bf16.msra.mxu0 0
        %999 = vmatprep.subr.bf16.mxu0 0
        %1000 = vmatpush1.bf16.msra.mxu0 %v983
        %1001 = vmatprep.subr.bf16.mxu0 0
        %1002 = vmatpush2.bf16.msra.mxu0 0
        %1003 = vmatprep.subr.bf16.mxu0 0
        %1004 = vmatpush2.bf16.msra.mxu0 0
        %1005 = vmatprep.subr.bf16.mxu0 0
        %1006 = vmatpush2.bf16.msra.mxu0 0
        %1007 = vmatprep.subr.bf16.mxu0 0
        %1008 = vmatpush2.bf16.msra.mxu0 0
        %1009 = vmatprep.subr.bf16.mxu0 0
        %1010 = vmatpush2.bf16.msra.mxu0 0
        %1011 = vmatprep.subr.bf16.mxu0 0
        %1012 = vmatpush2.bf16.msra.mxu0 0
        %1013 = vmatprep.subr.bf16.mxu0 0
        %1014 = vmatpush2.bf16.msra.mxu0 0
        %1015 = vmatprep.subr.bf16.mxu0 0
        %1016 = vmatpush2.bf16.msra.mxu0 0
        %1017 = vmatprep.mubr.bf16.mxu0 0
        %1018 = vmatmul.mubr.bf16.gmra.mxu0 %v980
        %v1019 = vpop.f32.mrf.mxu0
        %v1020 = vadd.f32 0.0, %v1019
        %v1021 = vpop.f32.mrf.mxu0
        %v1022 = vpop.f32.mrf.mxu0
        %v1023 = vpop.f32.mrf.mxu0
        %1024 = vdwg.mxu0
        %1025 = vrot.lane.b32.xlu0 %v803, 120
        %v1026 = vpop.permute.xlu0 %1025
        %1027 = vrot.lane.b32.xlu0 %v803, 88
        %v1028 = vpop.permute.xlu0 %1027
        %v1030 = vsel %vm807, %v1026, 0
        %v1033 = vsel %vm807, %v1028, 0
        %1035 = vmatprep.subr.bf16.mxu0 0
        %1036 = vmatpush1.bf16.xpose.msra.mxu0 0
        %1037 = vmatprep.subr.bf16.mxu0 0
        %1038 = vmatpush1.bf16.xpose.msra.mxu0 0
        %1039 = vmatprep.subr.bf16.mxu0 0
        %1040 = vmatpush1.bf16.xpose.msra.mxu0 0
        %1041 = vmatprep.subr.bf16.mxu0 0
        %1042 = vmatpush1.bf16.xpose.msra.mxu0 0
        %1043 = vmatprep.subr.bf16.mxu0 0
        %1044 = vmatpush1.bf16.xpose.msra.mxu0 0
        %1045 = vmatprep.subr.bf16.mxu0 0
        %1046 = vmatpush1.bf16.xpose.msra.mxu0 0
        %1047 = vmatprep.subr.bf16.mxu0 0
        %1048 = vmatpush1.bf16.xpose.msra.mxu0 0
        %1049 = vmatprep.subr.bf16.mxu0 0
        %1050 = vmatpush1.bf16.xpose.msra.mxu0 %v1033
        %1051 = vmatprep.subr.bf16.mxu0 0
        %1052 = vmatpush2.bf16.xpose.msra.mxu0 0
        %1053 = vmatprep.subr.bf16.mxu0 0
        %1054 = vmatpush2.bf16.xpose.msra.mxu0 0
        %1055 = vmatprep.subr.bf16.mxu0 0
        %1056 = vmatpush2.bf16.xpose.msra.mxu0 0
        %1057 = vmatprep.subr.bf16.mxu0 0
        %1058 = vmatpush2.bf16.xpose.msra.mxu0 0
        %1059 = vmatprep.subr.bf16.mxu0 0
        %1060 = vmatpush2.bf16.xpose.msra.mxu0 0
        %1061 = vmatprep.subr.bf16.mxu0 0
        %1062 = vmatpush2.bf16.xpose.msra.mxu0 0
        %1063 = vmatprep.subr.bf16.mxu0 0
        %1064 = vmatpush2.bf16.xpose.msra.mxu0 0
        %1065 = vmatprep.subr.bf16.mxu0 0
        %1066 = vmatpush2.bf16.xpose.msra.mxu0 0
        %1067 = vmatprep.mubr.bf16.mxu0 0
        %1068 = vmatmul.mubr.bf16.gmra.mxu0 %v1030
        %v1069 = vpop.f32.mrf.mxu0
        %v1070 = vadd.f32 0.0, %v1069
        %v1071 = vpop.f32.mrf.mxu0
        %v1072 = vpop.f32.mrf.mxu0
        %v1073 = vpop.f32.mrf.mxu0
        %1074 = vdwg.mxu0
        %1075 = vrot.lane.b32.xlu0 %v804, 120
        %v1076 = vpop.permute.xlu0 %1075
        %1077 = vrot.lane.b32.xlu0 %v804, 88
        %v1078 = vpop.permute.xlu0 %1077
        %v1080 = vsel %vm807, %v1076, 0
        %v1083 = vsel %vm807, %v1078, 0
        %1085 = vmatprep.subr.bf16.mxu0 0
        %1086 = vmatpush1.bf16.xpose.msra.mxu0 0
        %1087 = vmatprep.subr.bf16.mxu0 0
        %1088 = vmatpush1.bf16.xpose.msra.mxu0 0
        %1089 = vmatprep.subr.bf16.mxu0 0
        %1090 = vmatpush1.bf16.xpose.msra.mxu0 0
        %1091 = vmatprep.subr.bf16.mxu0 0
        %1092 = vmatpush1.bf16.xpose.msra.mxu0 0
        %1093 = vmatprep.subr.bf16.mxu0 0
        %1094 = vmatpush1.bf16.xpose.msra.mxu0 0
        %1095 = vmatprep.subr.bf16.mxu0 0
        %1096 = vmatpush1.bf16.xpose.msra.mxu0 0
        %1097 = vmatprep.subr.bf16.mxu0 0
        %1098 = vmatpush1.bf16.xpose.msra.mxu0 0
        %1099 = vmatprep.subr.bf16.mxu0 0
        %1100 = vmatpush1.bf16.xpose.msra.mxu0 %v1083
        %1101 = vmatprep.subr.bf16.mxu0 0
        %1102 = vmatpush2.bf16.xpose.msra.mxu0 0
        %1103 = vmatprep.subr.bf16.mxu0 0
        %1104 = vmatpush2.bf16.xpose.msra.mxu0 0
        %1105 = vmatprep.subr.bf16.mxu0 0
        %1106 = vmatpush2.bf16.xpose.msra.mxu0 0
        %1107 = vmatprep.subr.bf16.mxu0 0
        %1108 = vmatpush2.bf16.xpose.msra.mxu0 0
        %1109 = vmatprep.subr.bf16.mxu0 0
        %1110 = vmatpush2.bf16.xpose.msra.mxu0 0
        %1111 = vmatprep.subr.bf16.mxu0 0
        %1112 = vmatpush2.bf16.xpose.msra.mxu0 0
        %1113 = vmatprep.subr.bf16.mxu0 0
        %1114 = vmatpush2.bf16.xpose.msra.mxu0 0
        %1115 = vmatprep.subr.bf16.mxu0 0
        %1116 = vmatpush2.bf16.xpose.msra.mxu0 0
        %1117 = vmatprep.mubr.bf16.mxu0 0
        %1118 = vmatmul.mubr.bf16.gmra.mxu0 %v1080
        %v1119 = vpop.f32.mrf.mxu0
        %v1120 = vadd.f32 0.0, %v1119
        %v1121 = vpop.f32.mrf.mxu0
        %v1122 = vpop.f32.mrf.mxu0
        %v1123 = vpop.f32.mrf.mxu0
        %1124 = vdwg.mxu0
        %v1125 = vsel %vm799, %v1070, -1e+30
        %v1126 = vsel %vm799, %v1120, -1e+30
        %v1127 = vsel %vm807, %v1125, -inf
        %1128 = vmax.xlane.f32.xlu0 %v1127
        %v1129 = vpop.xlane.xlu0 %1128
        %v1130 = vsel %vm807, %v1126, -inf
        %1131 = vmax.xlane.f32.xlu0 %v1130
        %v1132 = vpop.xlane.xlu0 %1131
        %v1133 = vsub.f32 %v1125, %v1129
        %v1134 = vsub.f32 %v1126, %v1132
        %v1135 = vmul.f32 %v1133, 1.442695
        %v1136 = vpow.pop %v1135
        %v1137 = vmul.f32 %v1134, 1.442695
        %v1138 = vpow.pop %v1137
        %v1139 = vsel %vm807, %v1136, 0.0
        %1140 = vadd.xlane.f32.xlu0 %v1139
        %v1141 = vpop.xlane.xlu0 %1140
        %v1142 = vsel %vm807, %v1138, 0.0
        %1143 = vadd.xlane.f32.xlu0 %v1142
        %v1144 = vpop.xlane.xlu0 %1143
        %v1145 = vrcp.pop %v1141
        %v1146 = vmul.f32 %v1136, %v1145
        %v1147 = vrcp.pop %v1144
        %v1148 = vmul.f32 %v1138, %v1147
        %v1149 = vpack.c.bf16 %v1146, %v1146
        %v1150 = vpack.c.bf16 %v1148, %v1148
        %1151 = vrot.lane.b32.xlu0 %v803, 56
        %v1152 = vpop.permute.xlu0 %1151
        %v1154 = vsel %vm807, %v1149, 0
        %v1157 = vsel %vm933, %v1152, 0
        %1159 = vmatprep.subr.bf16.mxu0 0
        %1160 = vmatpush1.bf16.msra.mxu0 0
        %1161 = vmatprep.subr.bf16.mxu0 0
        %1162 = vmatpush1.bf16.msra.mxu0 0
        %1163 = vmatprep.subr.bf16.mxu0 0
        %1164 = vmatpush1.bf16.msra.mxu0 0
        %1165 = vmatprep.subr.bf16.mxu0 0
        %1166 = vmatpush1.bf16.msra.mxu0 0
        %1167 = vmatprep.subr.bf16.mxu0 0
        %1168 = vmatpush1.bf16.msra.mxu0 0
        %1169 = vmatprep.subr.bf16.mxu0 0
        %1170 = vmatpush1.bf16.msra.mxu0 0
        %1171 = vmatprep.subr.bf16.mxu0 0
        %1172 = vmatpush1.bf16.msra.mxu0 0
        %1173 = vmatprep.subr.bf16.mxu0 0
        %1174 = vmatpush1.bf16.msra.mxu0 %v1157
        %1175 = vmatprep.subr.bf16.mxu0 0
        %1176 = vmatpush2.bf16.msra.mxu0 0
        %1177 = vmatprep.subr.bf16.mxu0 0
        %1178 = vmatpush2.bf16.msra.mxu0 0
        %1179 = vmatprep.subr.bf16.mxu0 0
        %1180 = vmatpush2.bf16.msra.mxu0 0
        %1181 = vmatprep.subr.bf16.mxu0 0
        %1182 = vmatpush2.bf16.msra.mxu0 0
        %1183 = vmatprep.subr.bf16.mxu0 0
        %1184 = vmatpush2.bf16.msra.mxu0 0
        %1185 = vmatprep.subr.bf16.mxu0 0
        %1186 = vmatpush2.bf16.msra.mxu0 0
        %1187 = vmatprep.subr.bf16.mxu0 0
        %1188 = vmatpush2.bf16.msra.mxu0 0
        %1189 = vmatprep.subr.bf16.mxu0 0
        %1190 = vmatpush2.bf16.msra.mxu0 0
        %1191 = vmatprep.mubr.bf16.mxu0 0
        %1192 = vmatmul.mubr.bf16.gmra.mxu0 %v1154
        %v1193 = vpop.f32.mrf.mxu0
        %v1194 = vadd.f32 0.0, %v1193
        %v1195 = vpop.f32.mrf.mxu0
        %v1196 = vpop.f32.mrf.mxu0
        %v1197 = vpop.f32.mrf.mxu0
        %1198 = vdwg.mxu0
        %1199 = vrot.lane.b32.xlu0 %v804, 56
        %v1200 = vpop.permute.xlu0 %1199
        %v1202 = vsel %vm807, %v1150, 0
        %v1205 = vsel %vm933, %v1200, 0
        %1207 = vmatprep.subr.bf16.mxu0 0
        %1208 = vmatpush1.bf16.msra.mxu0 0
        %1209 = vmatprep.subr.bf16.mxu0 0
        %1210 = vmatpush1.bf16.msra.mxu0 0
        %1211 = vmatprep.subr.bf16.mxu0 0
        %1212 = vmatpush1.bf16.msra.mxu0 0
        %1213 = vmatprep.subr.bf16.mxu0 0
        %1214 = vmatpush1.bf16.msra.mxu0 0
        %1215 = vmatprep.subr.bf16.mxu0 0
        %1216 = vmatpush1.bf16.msra.mxu0 0
        %1217 = vmatprep.subr.bf16.mxu0 0
        %1218 = vmatpush1.bf16.msra.mxu0 0
        %1219 = vmatprep.subr.bf16.mxu0 0
        %1220 = vmatpush1.bf16.msra.mxu0 0
        %1221 = vmatprep.subr.bf16.mxu0 0
        %1222 = vmatpush1.bf16.msra.mxu0 %v1205
        %1223 = vmatprep.subr.bf16.mxu0 0
        %1224 = vmatpush2.bf16.msra.mxu0 0
        %1225 = vmatprep.subr.bf16.mxu0 0
        %1226 = vmatpush2.bf16.msra.mxu0 0
        %1227 = vmatprep.subr.bf16.mxu0 0
        %1228 = vmatpush2.bf16.msra.mxu0 0
        %1229 = vmatprep.subr.bf16.mxu0 0
        %1230 = vmatpush2.bf16.msra.mxu0 0
        %1231 = vmatprep.subr.bf16.mxu0 0
        %1232 = vmatpush2.bf16.msra.mxu0 0
        %1233 = vmatprep.subr.bf16.mxu0 0
        %1234 = vmatpush2.bf16.msra.mxu0 0
        %1235 = vmatprep.subr.bf16.mxu0 0
        %1236 = vmatpush2.bf16.msra.mxu0 0
        %1237 = vmatprep.subr.bf16.mxu0 0
        %1238 = vmatpush2.bf16.msra.mxu0 0
        %1239 = vmatprep.mubr.bf16.mxu0 0
        %1240 = vmatmul.mubr.bf16.gmra.mxu0 %v1202
        %v1241 = vpop.f32.mrf.mxu0
        %v1242 = vadd.f32 0.0, %v1241
        %v1243 = vpop.f32.mrf.mxu0
        %v1244 = vpop.f32.mrf.mxu0
        %v1245 = vpop.f32.mrf.mxu0
        %1246 = vdwg.mxu0
        %1247 = vrot.lane.b32.xlu0 %v803, 112
        %v1248 = vpop.permute.xlu0 %1247
        %1249 = vrot.lane.b32.xlu0 %v803, 80
        %v1250 = vpop.permute.xlu0 %1249
        %v1252 = vsel %vm807, %v1248, 0
        %v1255 = vsel %vm807, %v1250, 0
        %1257 = vmatprep.subr.bf16.mxu0 0
        %1258 = vmatpush1.bf16.xpose.msra.mxu0 0
        %1259 = vmatprep.subr.bf16.mxu0 0
        %1260 = vmatpush1.bf16.xpose.msra.mxu0 0
        %1261 = vmatprep.subr.bf16.mxu0 0
        %1262 = vmatpush1.bf16.xpose.msra.mxu0 0
        %1263 = vmatprep.subr.bf16.mxu0 0
        %1264 = vmatpush1.bf16.xpose.msra.mxu0 0
        %1265 = vmatprep.subr.bf16.mxu0 0
        %1266 = vmatpush1.bf16.xpose.msra.mxu0 0
        %1267 = vmatprep.subr.bf16.mxu0 0
        %1268 = vmatpush1.bf16.xpose.msra.mxu0 0
        %1269 = vmatprep.subr.bf16.mxu0 0
        %1270 = vmatpush1.bf16.xpose.msra.mxu0 0
        %1271 = vmatprep.subr.bf16.mxu0 0
        %1272 = vmatpush1.bf16.xpose.msra.mxu0 %v1255
        %1273 = vmatprep.subr.bf16.mxu0 0
        %1274 = vmatpush2.bf16.xpose.msra.mxu0 0
        %1275 = vmatprep.subr.bf16.mxu0 0
        %1276 = vmatpush2.bf16.xpose.msra.mxu0 0
        %1277 = vmatprep.subr.bf16.mxu0 0
        %1278 = vmatpush2.bf16.xpose.msra.mxu0 0
        %1279 = vmatprep.subr.bf16.mxu0 0
        %1280 = vmatpush2.bf16.xpose.msra.mxu0 0
        %1281 = vmatprep.subr.bf16.mxu0 0
        %1282 = vmatpush2.bf16.xpose.msra.mxu0 0
        %1283 = vmatprep.subr.bf16.mxu0 0
        %1284 = vmatpush2.bf16.xpose.msra.mxu0 0
        %1285 = vmatprep.subr.bf16.mxu0 0
        %1286 = vmatpush2.bf16.xpose.msra.mxu0 0
        %1287 = vmatprep.subr.bf16.mxu0 0
        %1288 = vmatpush2.bf16.xpose.msra.mxu0 0
        %1289 = vmatprep.mubr.bf16.mxu0 0
        %1290 = vmatmul.mubr.bf16.gmra.mxu0 %v1252
        %v1291 = vpop.f32.mrf.mxu0
        %v1292 = vadd.f32 0.0, %v1291
        %v1293 = vpop.f32.mrf.mxu0
        %v1294 = vpop.f32.mrf.mxu0
        %v1295 = vpop.f32.mrf.mxu0
        %1296 = vdwg.mxu0
        %1297 = vrot.lane.b32.xlu0 %v804, 112
        %v1298 = vpop.permute.xlu0 %1297
        %1299 = vrot.lane.b32.xlu0 %v804, 80
        %v1300 = vpop.permute.xlu0 %1299
        %v1302 = vsel %vm807, %v1298, 0
        %v1305 = vsel %vm807, %v1300, 0
        %1307 = vmatprep.subr.bf16.mxu0 0
        %1308 = vmatpush1.bf16.xpose.msra.mxu0 0
        %1309 = vmatprep.subr.bf16.mxu0 0
        %1310 = vmatpush1.bf16.xpose.msra.mxu0 0
        %1311 = vmatprep.subr.bf16.mxu0 0
        %1312 = vmatpush1.bf16.xpose.msra.mxu0 0
        %1313 = vmatprep.subr.bf16.mxu0 0
        %1314 = vmatpush1.bf16.xpose.msra.mxu0 0
        %1315 = vmatprep.subr.bf16.mxu0 0
        %1316 = vmatpush1.bf16.xpose.msra.mxu0 0
        %1317 = vmatprep.subr.bf16.mxu0 0
        %1318 = vmatpush1.bf16.xpose.msra.mxu0 0
        %1319 = vmatprep.subr.bf16.mxu0 0
        %1320 = vmatpush1.bf16.xpose.msra.mxu0 0
        %1321 = vmatprep.subr.bf16.mxu0 0
        %1322 = vmatpush1.bf16.xpose.msra.mxu0 %v1305
        %1323 = vmatprep.subr.bf16.mxu0 0
        %1324 = vmatpush2.bf16.xpose.msra.mxu0 0
        %1325 = vmatprep.subr.bf16.mxu0 0
        %1326 = vmatpush2.bf16.xpose.msra.mxu0 0
        %1327 = vmatprep.subr.bf16.mxu0 0
        %1328 = vmatpush2.bf16.xpose.msra.mxu0 0
        %1329 = vmatprep.subr.bf16.mxu0 0
        %1330 = vmatpush2.bf16.xpose.msra.mxu0 0
        %1331 = vmatprep.subr.bf16.mxu0 0
        %1332 = vmatpush2.bf16.xpose.msra.mxu0 0
        %1333 = vmatprep.subr.bf16.mxu0 0
        %1334 = vmatpush2.bf16.xpose.msra.mxu0 0
        %1335 = vmatprep.subr.bf16.mxu0 0
        %1336 = vmatpush2.bf16.xpose.msra.mxu0 0
        %1337 = vmatprep.subr.bf16.mxu0 0
        %1338 = vmatpush2.bf16.xpose.msra.mxu0 0
        %1339 = vmatprep.mubr.bf16.mxu0 0
        %1340 = vmatmul.mubr.bf16.gmra.mxu0 %v1302
        %v1341 = vpop.f32.mrf.mxu0
        %v1342 = vadd.f32 0.0, %v1341
        %v1343 = vpop.f32.mrf.mxu0
        %v1344 = vpop.f32.mrf.mxu0
        %v1345 = vpop.f32.mrf.mxu0
        %1346 = vdwg.mxu0
        %v1347 = vsel %vm799, %v1292, -1e+30
        %v1348 = vsel %vm799, %v1342, -1e+30
        %v1349 = vsel %vm807, %v1347, -inf
        %1350 = vmax.xlane.f32.xlu0 %v1349
        %v1351 = vpop.xlane.xlu0 %1350
        %v1352 = vsel %vm807, %v1348, -inf
        %1353 = vmax.xlane.f32.xlu0 %v1352
        %v1354 = vpop.xlane.xlu0 %1353
        %v1355 = vsub.f32 %v1347, %v1351
        %v1356 = vsub.f32 %v1348, %v1354
        %v1357 = vmul.f32 %v1355, 1.442695
        %v1358 = vpow.pop %v1357
        %v1359 = vmul.f32 %v1356, 1.442695
        %v1360 = vpow.pop %v1359
        %v1361 = vsel %vm807, %v1358, 0.0
        %1362 = vadd.xlane.f32.xlu0 %v1361
        %v1363 = vpop.xlane.xlu0 %1362
        %v1364 = vsel %vm807, %v1360, 0.0
        %1365 = vadd.xlane.f32.xlu0 %v1364
        %v1366 = vpop.xlane.xlu0 %1365
        %v1367 = vrcp.pop %v1363
        %v1368 = vmul.f32 %v1358, %v1367
        %v1369 = vrcp.pop %v1366
        %v1370 = vmul.f32 %v1360, %v1369
        %v1371 = vpack.c.bf16 %v1368, %v1368
        %v1372 = vpack.c.bf16 %v1370, %v1370
        %1373 = vrot.lane.b32.xlu0 %v803, 48
        %v1374 = vpop.permute.xlu0 %1373
        %v1376 = vsel %vm807, %v1371, 0
        %v1379 = vsel %vm933, %v1374, 0
        %1381 = vmatprep.subr.bf16.mxu0 0
        %1382 = vmatpush1.bf16.msra.mxu0 0
        %1383 = vmatprep.subr.bf16.mxu0 0
        %1384 = vmatpush1.bf16.msra.mxu0 0
        %1385 = vmatprep.subr.bf16.mxu0 0
        %1386 = vmatpush1.bf16.msra.mxu0 0
        %1387 = vmatprep.subr.bf16.mxu0 0
        %1388 = vmatpush1.bf16.msra.mxu0 0
        %1389 = vmatprep.subr.bf16.mxu0 0
        %1390 = vmatpush1.bf16.msra.mxu0 0
        %1391 = vmatprep.subr.bf16.mxu0 0
        %1392 = vmatpush1.bf16.msra.mxu0 0
        %1393 = vmatprep.subr.bf16.mxu0 0
        %1394 = vmatpush1.bf16.msra.mxu0 0
        %1395 = vmatprep.subr.bf16.mxu0 0
        %1396 = vmatpush1.bf16.msra.mxu0 %v1379
        %1397 = vmatprep.subr.bf16.mxu0 0
        %1398 = vmatpush2.bf16.msra.mxu0 0
        %1399 = vmatprep.subr.bf16.mxu0 0
        %1400 = vmatpush2.bf16.msra.mxu0 0
        %1401 = vmatprep.subr.bf16.mxu0 0
        %1402 = vmatpush2.bf16.msra.mxu0 0
        %1403 = vmatprep.subr.bf16.mxu0 0
        %1404 = vmatpush2.bf16.msra.mxu0 0
        %1405 = vmatprep.subr.bf16.mxu0 0
        %1406 = vmatpush2.bf16.msra.mxu0 0
        %1407 = vmatprep.subr.bf16.mxu0 0
        %1408 = vmatpush2.bf16.msra.mxu0 0
        %1409 = vmatprep.subr.bf16.mxu0 0
        %1410 = vmatpush2.bf16.msra.mxu0 0
        %1411 = vmatprep.subr.bf16.mxu0 0
        %1412 = vmatpush2.bf16.msra.mxu0 0
        %1413 = vmatprep.mubr.bf16.mxu0 0
        %1414 = vmatmul.mubr.bf16.gmra.mxu0 %v1376
        %v1415 = vpop.f32.mrf.mxu0
        %v1416 = vadd.f32 0.0, %v1415
        %v1417 = vpop.f32.mrf.mxu0
        %v1418 = vpop.f32.mrf.mxu0
        %v1419 = vpop.f32.mrf.mxu0
        %1420 = vdwg.mxu0
        %1421 = vrot.lane.b32.xlu0 %v804, 48
        %v1422 = vpop.permute.xlu0 %1421
        %v1424 = vsel %vm807, %v1372, 0
        %v1427 = vsel %vm933, %v1422, 0
        %1429 = vmatprep.subr.bf16.mxu0 0
        %1430 = vmatpush1.bf16.msra.mxu0 0
        %1431 = vmatprep.subr.bf16.mxu0 0
        %1432 = vmatpush1.bf16.msra.mxu0 0
        %1433 = vmatprep.subr.bf16.mxu0 0
        %1434 = vmatpush1.bf16.msra.mxu0 0
        %1435 = vmatprep.subr.bf16.mxu0 0
        %1436 = vmatpush1.bf16.msra.mxu0 0
        %1437 = vmatprep.subr.bf16.mxu0 0
        %1438 = vmatpush1.bf16.msra.mxu0 0
        %1439 = vmatprep.subr.bf16.mxu0 0
        %1440 = vmatpush1.bf16.msra.mxu0 0
        %1441 = vmatprep.subr.bf16.mxu0 0
        %1442 = vmatpush1.bf16.msra.mxu0 0
        %1443 = vmatprep.subr.bf16.mxu0 0
        %1444 = vmatpush1.bf16.msra.mxu0 %v1427
        %1445 = vmatprep.subr.bf16.mxu0 0
        %1446 = vmatpush2.bf16.msra.mxu0 0
        %1447 = vmatprep.subr.bf16.mxu0 0
        %1448 = vmatpush2.bf16.msra.mxu0 0
        %1449 = vmatprep.subr.bf16.mxu0 0
        %1450 = vmatpush2.bf16.msra.mxu0 0
        %1451 = vmatprep.subr.bf16.mxu0 0
        %1452 = vmatpush2.bf16.msra.mxu0 0
        %1453 = vmatprep.subr.bf16.mxu0 0
        %1454 = vmatpush2.bf16.msra.mxu0 0
        %1455 = vmatprep.subr.bf16.mxu0 0
        %1456 = vmatpush2.bf16.msra.mxu0 0
        %1457 = vmatprep.subr.bf16.mxu0 0
        %1458 = vmatpush2.bf16.msra.mxu0 0
        %1459 = vmatprep.subr.bf16.mxu0 0
        %1460 = vmatpush2.bf16.msra.mxu0 0
        %1461 = vmatprep.mubr.bf16.mxu0 0
        %1462 = vmatmul.mubr.bf16.gmra.mxu0 %v1424
        %v1463 = vpop.f32.mrf.mxu0
        %v1464 = vadd.f32 0.0, %v1463
        %v1465 = vpop.f32.mrf.mxu0
        %v1466 = vpop.f32.mrf.mxu0
        %v1467 = vpop.f32.mrf.mxu0
        %1468 = vdwg.mxu0
        %1469 = vrot.lane.b32.xlu0 %v803, 104
        %v1470 = vpop.permute.xlu0 %1469
        %1471 = vrot.lane.b32.xlu0 %v803, 72
        %v1472 = vpop.permute.xlu0 %1471
        %v1474 = vsel %vm807, %v1470, 0
        %v1477 = vsel %vm807, %v1472, 0
        %1479 = vmatprep.subr.bf16.mxu0 0
        %1480 = vmatpush1.bf16.xpose.msra.mxu0 0
        %1481 = vmatprep.subr.bf16.mxu0 0
        %1482 = vmatpush1.bf16.xpose.msra.mxu0 0
        %1483 = vmatprep.subr.bf16.mxu0 0
        %1484 = vmatpush1.bf16.xpose.msra.mxu0 0
        %1485 = vmatprep.subr.bf16.mxu0 0
        %1486 = vmatpush1.bf16.xpose.msra.mxu0 0
        %1487 = vmatprep.subr.bf16.mxu0 0
        %1488 = vmatpush1.bf16.xpose.msra.mxu0 0
        %1489 = vmatprep.subr.bf16.mxu0 0
        %1490 = vmatpush1.bf16.xpose.msra.mxu0 0
        %1491 = vmatprep.subr.bf16.mxu0 0
        %1492 = vmatpush1.bf16.xpose.msra.mxu0 0
        %1493 = vmatprep.subr.bf16.mxu0 0
        %1494 = vmatpush1.bf16.xpose.msra.mxu0 %v1477
        %1495 = vmatprep.subr.bf16.mxu0 0
        %1496 = vmatpush2.bf16.xpose.msra.mxu0 0
        %1497 = vmatprep.subr.bf16.mxu0 0
        %1498 = vmatpush2.bf16.xpose.msra.mxu0 0
        %1499 = vmatprep.subr.bf16.mxu0 0
        %1500 = vmatpush2.bf16.xpose.msra.mxu0 0
        %1501 = vmatprep.subr.bf16.mxu0 0
        %1502 = vmatpush2.bf16.xpose.msra.mxu0 0
        %1503 = vmatprep.subr.bf16.mxu0 0
        %1504 = vmatpush2.bf16.xpose.msra.mxu0 0
        %1505 = vmatprep.subr.bf16.mxu0 0
        %1506 = vmatpush2.bf16.xpose.msra.mxu0 0
        %1507 = vmatprep.subr.bf16.mxu0 0
        %1508 = vmatpush2.bf16.xpose.msra.mxu0 0
        %1509 = vmatprep.subr.bf16.mxu0 0
        %1510 = vmatpush2.bf16.xpose.msra.mxu0 0
        %1511 = vmatprep.mubr.bf16.mxu0 0
        %1512 = vmatmul.mubr.bf16.gmra.mxu0 %v1474
        %v1513 = vpop.f32.mrf.mxu0
        %v1514 = vadd.f32 0.0, %v1513
        %v1515 = vpop.f32.mrf.mxu0
        %v1516 = vpop.f32.mrf.mxu0
        %v1517 = vpop.f32.mrf.mxu0
        %1518 = vdwg.mxu0
        %1519 = vrot.lane.b32.xlu0 %v804, 104
        %v1520 = vpop.permute.xlu0 %1519
        %1521 = vrot.lane.b32.xlu0 %v804, 72
        %v1522 = vpop.permute.xlu0 %1521
        %v1524 = vsel %vm807, %v1520, 0
        %v1527 = vsel %vm807, %v1522, 0
        %1529 = vmatprep.subr.bf16.mxu0 0
        %1530 = vmatpush1.bf16.xpose.msra.mxu0 0
        %1531 = vmatprep.subr.bf16.mxu0 0
        %1532 = vmatpush1.bf16.xpose.msra.mxu0 0
        %1533 = vmatprep.subr.bf16.mxu0 0
        %1534 = vmatpush1.bf16.xpose.msra.mxu0 0
        %1535 = vmatprep.subr.bf16.mxu0 0
        %1536 = vmatpush1.bf16.xpose.msra.mxu0 0
        %1537 = vmatprep.subr.bf16.mxu0 0
        %1538 = vmatpush1.bf16.xpose.msra.mxu0 0
        %1539 = vmatprep.subr.bf16.mxu0 0
        %1540 = vmatpush1.bf16.xpose.msra.mxu0 0
        %1541 = vmatprep.subr.bf16.mxu0 0
        %1542 = vmatpush1.bf16.xpose.msra.mxu0 0
        %1543 = vmatprep.subr.bf16.mxu0 0
        %1544 = vmatpush1.bf16.xpose.msra.mxu0 %v1527
        %1545 = vmatprep.subr.bf16.mxu0 0
        %1546 = vmatpush2.bf16.xpose.msra.mxu0 0
        %1547 = vmatprep.subr.bf16.mxu0 0
        %1548 = vmatpush2.bf16.xpose.msra.mxu0 0
        %1549 = vmatprep.subr.bf16.mxu0 0
        %1550 = vmatpush2.bf16.xpose.msra.mxu0 0
        %1551 = vmatprep.subr.bf16.mxu0 0
        %1552 = vmatpush2.bf16.xpose.msra.mxu0 0
        %1553 = vmatprep.subr.bf16.mxu0 0
        %1554 = vmatpush2.bf16.xpose.msra.mxu0 0
        %1555 = vmatprep.subr.bf16.mxu0 0
        %1556 = vmatpush2.bf16.xpose.msra.mxu0 0
        %1557 = vmatprep.subr.bf16.mxu0 0
        %1558 = vmatpush2.bf16.xpose.msra.mxu0 0
        %1559 = vmatprep.subr.bf16.mxu0 0
        %1560 = vmatpush2.bf16.xpose.msra.mxu0 0
        %1561 = vmatprep.mubr.bf16.mxu0 0
        %1562 = vmatmul.mubr.bf16.gmra.mxu0 %v1524
        %v1563 = vpop.f32.mrf.mxu0
        %v1564 = vadd.f32 0.0, %v1563
        %v1565 = vpop.f32.mrf.mxu0
        %v1566 = vpop.f32.mrf.mxu0
        %v1567 = vpop.f32.mrf.mxu0
        %1568 = vdwg.mxu0
        %v1569 = vsel %vm799, %v1514, -1e+30
        %v1570 = vsel %vm799, %v1564, -1e+30
        %v1571 = vsel %vm807, %v1569, -inf
        %1572 = vmax.xlane.f32.xlu0 %v1571
        %v1573 = vpop.xlane.xlu0 %1572
        %v1574 = vsel %vm807, %v1570, -inf
        %1575 = vmax.xlane.f32.xlu0 %v1574
        %v1576 = vpop.xlane.xlu0 %1575
        %v1577 = vsub.f32 %v1569, %v1573
        %v1578 = vsub.f32 %v1570, %v1576
        %v1579 = vmul.f32 %v1577, 1.442695
        %v1580 = vpow.pop %v1579
        %v1581 = vmul.f32 %v1578, 1.442695
        %v1582 = vpow.pop %v1581
        %v1583 = vsel %vm807, %v1580, 0.0
        %1584 = vadd.xlane.f32.xlu0 %v1583
        %v1585 = vpop.xlane.xlu0 %1584
        %v1586 = vsel %vm807, %v1582, 0.0
        %1587 = vadd.xlane.f32.xlu0 %v1586
        %v1588 = vpop.xlane.xlu0 %1587
        %v1589 = vrcp.pop %v1585
        %v1590 = vmul.f32 %v1580, %v1589
        %v1591 = vrcp.pop %v1588
        %v1592 = vmul.f32 %v1582, %v1591
        %v1593 = vpack.c.bf16 %v1590, %v1590
        %v1594 = vpack.c.bf16 %v1592, %v1592
        %1595 = vrot.lane.b32.xlu0 %v803, 40
        %v1596 = vpop.permute.xlu0 %1595
        %v1598 = vsel %vm807, %v1593, 0
        %v1601 = vsel %vm933, %v1596, 0
        %1603 = vmatprep.subr.bf16.mxu0 0
        %1604 = vmatpush1.bf16.msra.mxu0 0
        %1605 = vmatprep.subr.bf16.mxu0 0
        %1606 = vmatpush1.bf16.msra.mxu0 0
        %1607 = vmatprep.subr.bf16.mxu0 0
        %1608 = vmatpush1.bf16.msra.mxu0 0
        %1609 = vmatprep.subr.bf16.mxu0 0
        %1610 = vmatpush1.bf16.msra.mxu0 0
        %1611 = vmatprep.subr.bf16.mxu0 0
        %1612 = vmatpush1.bf16.msra.mxu0 0
        %1613 = vmatprep.subr.bf16.mxu0 0
        %1614 = vmatpush1.bf16.msra.mxu0 0
        %1615 = vmatprep.subr.bf16.mxu0 0
        %1616 = vmatpush1.bf16.msra.mxu0 0
        %1617 = vmatprep.subr.bf16.mxu0 0
        %1618 = vmatpush1.bf16.msra.mxu0 %v1601
        %1619 = vmatprep.subr.bf16.mxu0 0
        %1620 = vmatpush2.bf16.msra.mxu0 0
        %1621 = vmatprep.subr.bf16.mxu0 0
        %1622 = vmatpush2.bf16.msra.mxu0 0
        %1623 = vmatprep.subr.bf16.mxu0 0
        %1624 = vmatpush2.bf16.msra.mxu0 0
        %1625 = vmatprep.subr.bf16.mxu0 0
        %1626 = vmatpush2.bf16.msra.mxu0 0
        %1627 = vmatprep.subr.bf16.mxu0 0
        %1628 = vmatpush2.bf16.msra.mxu0 0
        %1629 = vmatprep.subr.bf16.mxu0 0
        %1630 = vmatpush2.bf16.msra.mxu0 0
        %1631 = vmatprep.subr.bf16.mxu0 0
        %1632 = vmatpush2.bf16.msra.mxu0 0
        %1633 = vmatprep.subr.bf16.mxu0 0
        %1634 = vmatpush2.bf16.msra.mxu0 0
        %1635 = vmatprep.mubr.bf16.mxu0 0
        %1636 = vmatmul.mubr.bf16.gmra.mxu0 %v1598
        %v1637 = vpop.f32.mrf.mxu0
        %v1638 = vadd.f32 0.0, %v1637
        %v1639 = vpop.f32.mrf.mxu0
        %v1640 = vpop.f32.mrf.mxu0
        %v1641 = vpop.f32.mrf.mxu0
        %1642 = vdwg.mxu0
        %1643 = vrot.lane.b32.xlu0 %v804, 40
        %v1644 = vpop.permute.xlu0 %1643
        %v1646 = vsel %vm807, %v1594, 0
        %v1649 = vsel %vm933, %v1644, 0
        %1651 = vmatprep.subr.bf16.mxu0 0
        %1652 = vmatpush1.bf16.msra.mxu0 0
        %1653 = vmatprep.subr.bf16.mxu0 0
        %1654 = vmatpush1.bf16.msra.mxu0 0
        %1655 = vmatprep.subr.bf16.mxu0 0
        %1656 = vmatpush1.bf16.msra.mxu0 0
        %1657 = vmatprep.subr.bf16.mxu0 0
        %1658 = vmatpush1.bf16.msra.mxu0 0
        %1659 = vmatprep.subr.bf16.mxu0 0
        %1660 = vmatpush1.bf16.msra.mxu0 0
        %1661 = vmatprep.subr.bf16.mxu0 0
        %1662 = vmatpush1.bf16.msra.mxu0 0
        %1663 = vmatprep.subr.bf16.mxu0 0
        %1664 = vmatpush1.bf16.msra.mxu0 0
        %1665 = vmatprep.subr.bf16.mxu0 0
        %1666 = vmatpush1.bf16.msra.mxu0 %v1649
        %1667 = vmatprep.subr.bf16.mxu0 0
        %1668 = vmatpush2.bf16.msra.mxu0 0
        %1669 = vmatprep.subr.bf16.mxu0 0
        %1670 = vmatpush2.bf16.msra.mxu0 0
        %1671 = vmatprep.subr.bf16.mxu0 0
        %1672 = vmatpush2.bf16.msra.mxu0 0
        %1673 = vmatprep.subr.bf16.mxu0 0
        %1674 = vmatpush2.bf16.msra.mxu0 0
        %1675 = vmatprep.subr.bf16.mxu0 0
        %1676 = vmatpush2.bf16.msra.mxu0 0
        %1677 = vmatprep.subr.bf16.mxu0 0
        %1678 = vmatpush2.bf16.msra.mxu0 0
        %1679 = vmatprep.subr.bf16.mxu0 0
        %1680 = vmatpush2.bf16.msra.mxu0 0
        %1681 = vmatprep.subr.bf16.mxu0 0
        %1682 = vmatpush2.bf16.msra.mxu0 0
        %1683 = vmatprep.mubr.bf16.mxu0 0
        %1684 = vmatmul.mubr.bf16.gmra.mxu0 %v1646
        %v1685 = vpop.f32.mrf.mxu0
        %v1686 = vadd.f32 0.0, %v1685
        %v1687 = vpop.f32.mrf.mxu0
        %v1688 = vpop.f32.mrf.mxu0
        %v1689 = vpop.f32.mrf.mxu0
        %1690 = vdwg.mxu0
        %1693 = vrot.lane.b32.xlu0 %v1194, 8
        %v1694 = vpop.permute.xlu0 %1693
        %1695 = vrot.lane.b32.xlu0 %v1242, 8
        %v1696 = vpop.permute.xlu0 %1695
        %1701 = vrot.lane.b32.xlu0 %v1416, 16
        %v1702 = vpop.permute.xlu0 %1701
        %1703 = vrot.lane.b32.xlu0 %v1464, 16
        %v1704 = vpop.permute.xlu0 %1703
        %1709 = vrot.lane.b32.xlu0 %v1638, 24
        %v1710 = vpop.permute.xlu0 %1709
        %1711 = vrot.lane.b32.xlu0 %v1686, 24
        %v1712 = vpop.permute.xlu0 %1711
        %v1715 = vsel %vm807, %v972, %v1694
        %v1716 = vsel %vm807, %v1020, %v1696
        %vm1717 = vcmask 130048
        %v1718 = vsel %vm1717, %v1715, %v1702
        %v1719 = vsel %vm1717, %v1716, %v1704
        %vm1720 = vcmask 195584
        %v1721 = vsel %vm1720, %v1718, %v1710
        %v1722 = vsel %vm1720, %v1719, %v1712
        %v1723 = vpack.c.bf16 %v1722, %v1721
        %v1724 = vld [vmem:[%s611] sm:$0xf]
        %v1725 = vld [vmem:[%s611 + $0x4] sm:$0xf]
        %v1726 = vld [vmem:[%s611 + $0x8] sm:$0xf]
        %v1727 = vld [vmem:[%s611 + $0xc] sm:$0xf]
        %v1732 = vunpack.c.l.b16 %v1724
        %v1733 = vunpack.c.l.b16 %v1725
        %v1734 = vunpack.c.l.b16 %v1726
        %v1735 = vunpack.c.l.b16 %v1727
        %v1736 = vpack.c.b16 %v1733, %v1732
        %v1737 = vpack.c.b16 %v1735, %v1734
        %vm1740 = vcmask 261120
        %v1742 = vsel %vm1740, %v1723, 0
        %1744 = vmatprep.subr.bf16.mxu0 0
        %1745 = vmatpush1.bf16.msra.mxu0 0
        %1746 = vmatprep.subr.bf16.mxu0 0
        %1747 = vmatpush1.bf16.msra.mxu0 0
        %1748 = vmatprep.subr.bf16.mxu0 0
        %1749 = vmatpush1.bf16.msra.mxu0 0
        %1750 = vmatprep.subr.bf16.mxu0 0
        %1751 = vmatpush1.bf16.msra.mxu0 0
        %1752 = vmatprep.subr.bf16.mxu0 0
        %1753 = vmatpush1.bf16.msra.mxu0 0
        %1754 = vmatprep.subr.bf16.mxu0 0
        %1755 = vmatpush1.bf16.msra.mxu0 0
        %1756 = vmatprep.subr.bf16.mxu0 0
        %1757 = vmatpush1.bf16.msra.mxu0 %v1737
        %1758 = vmatprep.subr.bf16.mxu0 0
        %1759 = vmatpush1.bf16.msra.mxu0 %v1736
        %1760 = vmatprep.subr.bf16.mxu0 0
        %1761 = vmatpush2.bf16.msra.mxu0 0
        %1762 = vmatprep.subr.bf16.mxu0 0
        %1763 = vmatpush2.bf16.msra.mxu0 0
        %1764 = vmatprep.subr.bf16.mxu0 0
        %1765 = vmatpush2.bf16.msra.mxu0 0
        %1766 = vmatprep.subr.bf16.mxu0 0
        %1767 = vmatpush2.bf16.msra.mxu0 0
        %1768 = vmatprep.subr.bf16.mxu0 0
        %1769 = vmatpush2.bf16.msra.mxu0 0
        %1770 = vmatprep.subr.bf16.mxu0 0
        %1771 = vmatpush2.bf16.msra.mxu0 0
        %1772 = vmatprep.subr.bf16.mxu0 0
        %1773 = vmatpush2.bf16.msra.mxu0 0
        %1774 = vmatprep.subr.bf16.mxu0 0
        %1775 = vmatpush2.bf16.msra.mxu0 0
        %1776 = vmatprep.mubr.bf16.mxu0 0
        %1777 = vmatmul.mubr.bf16.gmra.mxu0 %v1742
        %v1778 = vpop.f32.mrf.mxu0
        %v1779 = vadd.f32 0.0, %v1778
        %v1780 = vpop.f32.mrf.mxu0
        %v1781 = vpop.f32.mrf.mxu0
        %v1782 = vadd.f32 0.0, %v1781
        %v1783 = vpop.f32.mrf.mxu0
        %1784 = vdwg.mxu0
        %v1785 = vadd.f32 %v641, %v1779
        %v1786 = vadd.f32 %v642, %v1782
        %v1787 = vld [vmem:[%s614] sm:$0x1]
        %v1789 = vlaneseq
        %v1790 = vshrl.u32 %v1789, 7
        %v1791 = vsub.s32 0, %v1790
        %v1792 = vrot.slane %v1787, %v1791
        %v1794 = vadd.f32 %v1785, %v1792
        %v1795 = vadd.f32 %v1786, %v1792
        %v1796 = vld [vmem:[%s617] sm:$0x1]
        %v1797 = vld [vmem:[%s620] sm:$0x1]
        %1798 = vadd.xlane.f32.xlu0 %v1794
        %v1799 = vpop.xlane.xlu0 %1798
        %1800 = vadd.xlane.f32.xlu0 %v1795
        %v1801 = vpop.xlane.xlu0 %1800
        %v1802 = vmul.f32 %v1799, 0.03125
        %v1803 = vmul.f32 %v1801, 0.03125
        %v1804 = vsub.f32 %v1794, %v1802
        %v1805 = vsub.f32 %v1795, %v1803
        %v1806 = vsel %vm657, %v1804, 0.0
        %v1807 = vsel %vm657, %v1805, 0.0
        %v1808 = vmul.f32 %v1806, %v1806
        %v1809 = vmul.f32 %v1807, %v1807
        %1810 = vadd.xlane.f32.xlu0 %v1808
        %v1811 = vpop.xlane.xlu0 %1810
        %1812 = vadd.xlane.f32.xlu0 %v1809
        %v1813 = vpop.xlane.xlu0 %1812
        %v1814 = vmul.f32 %v1811, 0.03125
        %v1815 = vmul.f32 %v1813, 0.03125
        %v1816 = vadd.f32 %v1814, 1e-05
        %v1817 = vadd.f32 %v1815, 1e-05
        %v1818 = vrsqrt.pop %v1816
        %v1819 = vrsqrt.pop %v1817
        %v1820 = vmul.f32 %v1806, %v1818
        %v1821 = vmul.f32 %v1807, %v1819
        %v1823 = vlaneseq
        %v1824 = vshrl.u32 %v1823, 7
        %v1825 = vsub.s32 0, %v1824
        %v1826 = vrot.slane %v1796, %v1825
        %v1828 = vmul.f32 %v1820, %v1826
        %v1829 = vmul.f32 %v1821, %v1826
        %v1831 = vlaneseq
        %v1832 = vshrl.u32 %v1831, 7
        %v1833 = vsub.s32 0, %v1832
        %v1834 = vrot.slane %v1797, %v1833
        %v1836 = vadd.f32 %v1828, %v1834
        %v1837 = vadd.f32 %v1829, %v1834
        %v1838 = vpack.c.bf16 %v1837, %v1836
        %v1839 = vld [vmem:[%s625] sm:$0xf]
        %v1840 = vld [vmem:[%s625 + $0x4] sm:$0xf]
        %v1841 = vld [vmem:[%s625 + $0x8] sm:$0xf]
        %v1842 = vld [vmem:[%s625 + $0xc] sm:$0xf]
        %v1843 = vld [vmem:[%s625 + $0x10] sm:$0xf]
        %v1844 = vld [vmem:[%s625 + $0x14] sm:$0xf]
        %v1845 = vld [vmem:[%s625 + $0x18] sm:$0xf]
        %v1846 = vld [vmem:[%s625 + $0x1c] sm:$0xf]
        %v1847 = vld [vmem:[%s625 + $0x20] sm:$0xf]
        %v1848 = vld [vmem:[%s625 + $0x24] sm:$0xf]
        %v1849 = vld [vmem:[%s625 + $0x28] sm:$0xf]
        %v1850 = vld [vmem:[%s625 + $0x2c] sm:$0xf]
        %v1851 = vld [vmem:[%s625 + $0x30] sm:$0xf]
        %v1852 = vld [vmem:[%s625 + $0x34] sm:$0xf]
        %v1853 = vld [vmem:[%s625 + $0x38] sm:$0xf]
        %v1854 = vld [vmem:[%s625 + $0x3c] sm:$0xf]
        %v1855 = vld [vmem:[%s628] sm:$0x1]
        %v1857 = vlaneseq
        %v1858 = vshrl.u32 %v1857, 7
        %v1859 = vsub.s32 0, %v1858
        %v1860 = vrot.slane %v1855, %v1859
        %v1878 = vunpack.c.l.b16 %v1839
        %v1879 = vunpack.c.l.b16 %v1840
        %v1880 = vunpack.c.l.b16 %v1841
        %v1881 = vunpack.c.l.b16 %v1842
        %v1882 = vunpack.c.l.b16 %v1843
        %v1883 = vunpack.c.l.b16 %v1844
        %v1884 = vunpack.c.l.b16 %v1845
        %v1885 = vunpack.c.l.b16 %v1846
        %v1886 = vunpack.c.l.b16 %v1847
        %v1887 = vunpack.c.l.b16 %v1848
        %v1888 = vunpack.c.l.b16 %v1849
        %v1889 = vunpack.c.l.b16 %v1850
        %v1890 = vunpack.c.l.b16 %v1851
        %v1891 = vunpack.c.l.b16 %v1852
        %v1892 = vunpack.c.l.b16 %v1853
        %v1893 = vunpack.c.l.b16 %v1854
        %v1894 = vpack.c.b16 %v1879, %v1878
        %v1895 = vpack.c.b16 %v1881, %v1880
        %v1896 = vpack.c.b16 %v1883, %v1882
        %v1897 = vpack.c.b16 %v1885, %v1884
        %v1898 = vpack.c.b16 %v1887, %v1886
        %v1899 = vpack.c.b16 %v1889, %v1888
        %v1900 = vpack.c.b16 %v1891, %v1890
        %v1901 = vpack.c.b16 %v1893, %v1892
        %1910 = vmatprep.subr.bf16.mxu0 0
        %1911 = vmatpush1.bf16.msra.mxu0 %v1901
        %1912 = vmatprep.subr.bf16.mxu0 0
        %1913 = vmatpush1.bf16.msra.mxu0 %v1900
        %1914 = vmatprep.subr.bf16.mxu0 0
        %1915 = vmatpush1.bf16.msra.mxu0 %v1899
        %1916 = vmatprep.subr.bf16.mxu0 0
        %1917 = vmatpush1.bf16.msra.mxu0 %v1898
        %1918 = vmatprep.subr.bf16.mxu0 0
        %1919 = vmatpush1.bf16.msra.mxu0 %v1897
        %1920 = vmatprep.subr.bf16.mxu0 0
        %1921 = vmatpush1.bf16.msra.mxu0 %v1896
        %1922 = vmatprep.subr.bf16.mxu0 0
        %1923 = vmatpush1.bf16.msra.mxu0 %v1895
        %1924 = vmatprep.subr.bf16.mxu0 0
        %1925 = vmatpush1.bf16.msra.mxu0 %v1894
        %1926 = vmatprep.subr.bf16.mxu0 0
        %1927 = vmatpush2.bf16.msra.mxu0 0
        %1928 = vmatprep.subr.bf16.mxu0 0
        %1929 = vmatpush2.bf16.msra.mxu0 0
        %1930 = vmatprep.subr.bf16.mxu0 0
        %1931 = vmatpush2.bf16.msra.mxu0 0
        %1932 = vmatprep.subr.bf16.mxu0 0
        %1933 = vmatpush2.bf16.msra.mxu0 0
        %1934 = vmatprep.subr.bf16.mxu0 0
        %1935 = vmatpush2.bf16.msra.mxu0 0
        %1936 = vmatprep.subr.bf16.mxu0 0
        %1937 = vmatpush2.bf16.msra.mxu0 0
        %1938 = vmatprep.subr.bf16.mxu0 0
        %1939 = vmatpush2.bf16.msra.mxu0 0
        %1940 = vmatprep.subr.bf16.mxu0 0
        %1941 = vmatpush2.bf16.msra.mxu0 0
        %1942 = vmatprep.mubr.bf16.mxu0 0
        %1943 = vmatmul.mubr.bf16.gmra.mxu0 %v1838
        %v1944 = vpop.f32.mrf.mxu0
        %v1945 = vadd.f32 %v1860, %v1944
        %v1946 = vpop.f32.mrf.mxu0
        %v1947 = vpop.f32.mrf.mxu0
        %v1948 = vadd.f32 %v1860, %v1947
        %v1949 = vpop.f32.mrf.mxu0
        %1950 = vdwg.mxu0
        %v1951 = vmax.f32 %v1945, 0.0
        %v1952 = vmax.f32 %v1948, 0.0
        %v1953 = vpack.c.bf16 %v1952, %v1951
        %v1954 = vld [vmem:[%s520] sm:$0xf]
        %v1955 = vld [vmem:[%s520 + $0x4] sm:$0xf]
        %v1956 = vld [vmem:[%s520 + $0x8] sm:$0xf]
        %v1957 = vld [vmem:[%s520 + $0xc] sm:$0xf]
        %v1958 = vld [vmem:[%s520 + $0x10] sm:$0xf]
        %v1959 = vld [vmem:[%s520 + $0x14] sm:$0xf]
        %v1960 = vld [vmem:[%s520 + $0x18] sm:$0xf]
        %v1961 = vld [vmem:[%s520 + $0x1c] sm:$0xf]
        %v1962 = vld [vmem:[%s520 + $0x20] sm:$0xf]
        %v1963 = vld [vmem:[%s520 + $0x24] sm:$0xf]
        %v1964 = vld [vmem:[%s520 + $0x28] sm:$0xf]
        %v1965 = vld [vmem:[%s520 + $0x2c] sm:$0xf]
        %v1966 = vld [vmem:[%s520 + $0x30] sm:$0xf]
        %v1967 = vld [vmem:[%s520 + $0x34] sm:$0xf]
        %v1968 = vld [vmem:[%s520 + $0x38] sm:$0xf]
        %v1969 = vld [vmem:[%s520 + $0x3c] sm:$0xf]
        %v1970 = vld [vmem:[%s631] sm:$0x1]
        %v1972 = vlaneseq
        %v1973 = vshrl.u32 %v1972, 7
        %v1974 = vsub.s32 0, %v1973
        %v1975 = vrot.slane %v1970, %v1974
        %v1993 = vunpack.c.l.b16 %v1954
        %v1994 = vunpack.c.l.b16 %v1955
        %v1995 = vunpack.c.l.b16 %v1956
        %v1996 = vunpack.c.l.b16 %v1957
        %v1997 = vunpack.c.l.b16 %v1958
        %v1998 = vunpack.c.l.b16 %v1959
        %v1999 = vunpack.c.l.b16 %v1960
        %v2000 = vunpack.c.l.b16 %v1961
        %v2001 = vunpack.c.l.b16 %v1962
        %v2002 = vunpack.c.l.b16 %v1963
        %v2003 = vunpack.c.l.b16 %v1964
        %v2004 = vunpack.c.l.b16 %v1965
        %v2005 = vunpack.c.l.b16 %v1966
        %v2006 = vunpack.c.l.b16 %v1967
        %v2007 = vunpack.c.l.b16 %v1968
        %v2008 = vunpack.c.l.b16 %v1969
        %v2009 = vpack.c.b16 %v1994, %v1993
        %v2010 = vpack.c.b16 %v1996, %v1995
        %v2011 = vpack.c.b16 %v1998, %v1997
        %v2012 = vpack.c.b16 %v2000, %v1999
        %v2013 = vpack.c.b16 %v2002, %v2001
        %v2014 = vpack.c.b16 %v2004, %v2003
        %v2015 = vpack.c.b16 %v2006, %v2005
        %v2016 = vpack.c.b16 %v2008, %v2007
        %2025 = vmatprep.subr.bf16.mxu0 0
        %2026 = vmatpush1.bf16.msra.mxu0 %v2016
        %2027 = vmatprep.subr.bf16.mxu0 0
        %2028 = vmatpush1.bf16.msra.mxu0 %v2015
        %2029 = vmatprep.subr.bf16.mxu0 0
        %2030 = vmatpush1.bf16.msra.mxu0 %v2014
        %2031 = vmatprep.subr.bf16.mxu0 0
        %2032 = vmatpush1.bf16.msra.mxu0 %v2013
        %2033 = vmatprep.subr.bf16.mxu0 0
        %2034 = vmatpush1.bf16.msra.mxu0 %v2012
        %2035 = vmatprep.subr.bf16.mxu0 0
        %2036 = vmatpush1.bf16.msra.mxu0 %v2011
        %2037 = vmatprep.subr.bf16.mxu0 0
        %2038 = vmatpush1.bf16.msra.mxu0 %v2010
        %2039 = vmatprep.subr.bf16.mxu0 0
        %2040 = vmatpush1.bf16.msra.mxu0 %v2009
        %2041 = vmatprep.subr.bf16.mxu0 0
        %2042 = vmatpush2.bf16.msra.mxu0 0
        %2043 = vmatprep.subr.bf16.mxu0 0
        %2044 = vmatpush2.bf16.msra.mxu0 0
        %2045 = vmatprep.subr.bf16.mxu0 0
        %2046 = vmatpush2.bf16.msra.mxu0 0
        %2047 = vmatprep.subr.bf16.mxu0 0
        %2048 = vmatpush2.bf16.msra.mxu0 0
        %2049 = vmatprep.subr.bf16.mxu0 0
        %2050 = vmatpush2.bf16.msra.mxu0 0
        %2051 = vmatprep.subr.bf16.mxu0 0
        %2052 = vmatpush2.bf16.msra.mxu0 0
        %2053 = vmatprep.subr.bf16.mxu0 0
        %2054 = vmatpush2.bf16.msra.mxu0 0
        %2055 = vmatprep.subr.bf16.mxu0 0
        %2056 = vmatpush2.bf16.msra.mxu0 0
        %2057 = vmatprep.mubr.bf16.mxu0 0
        %2058 = vmatmul.mubr.bf16.gmra.mxu0 %v1953
        %v2059 = vpop.f32.mrf.mxu0
        %v2060 = vadd.f32 %v1975, %v2059
        %v2061 = vpop.f32.mrf.mxu0
        %v2062 = vpop.f32.mrf.mxu0
        %v2063 = vadd.f32 %v1975, %v2062
        %v2064 = vpop.f32.mrf.mxu0
        %2065 = vdwg.mxu0
        %v2066 = vadd.f32 %v1794, %v2060
        %v2067 = vadd.f32 %v1795, %v2063
        %2068 = vst [vmem:[#allocation2] sm:$0xff] %v2066
        %2069 = vst [vmem:[#allocation2 + $0x8] sm:$0xff] %v2067
        %p2070 = scmp.eq.s32.totalorder %s29, 1
        // Predicated region
        $region85: #{tpu_custom_call.1} parent=75 // pred_check
          %p2071 = pneg %p2070
        $region86: #{tpu_custom_call.1} parent=75 // pred_check_branch
          %2073 = sbr.rel (%p2071) target = $region88
        $region87: #{tpu_custom_call.1} parent=75 // pred_region
          %v2074 = vld [vmem:[%s12] sm:$0x1]
          %v2075 = vld [vmem:[%s13] sm:$0x1]
          %2076 = vadd.xlane.f32.xlu0 %v2066
          %v2077 = vpop.xlane.xlu0 %2076
          %2078 = vadd.xlane.f32.xlu0 %v2067
          %v2079 = vpop.xlane.xlu0 %2078
          %v2080 = vmul.f32 %v2077, 0.03125
          %v2081 = vmul.f32 %v2079, 0.03125
          %v2082 = vsub.f32 %v2066, %v2080
          %v2083 = vsub.f32 %v2067, %v2081
          %v2084 = vsel %vm657, %v2082, 0.0
          %v2085 = vsel %vm657, %v2083, 0.0
          %v2086 = vmul.f32 %v2084, %v2084
          %v2087 = vmul.f32 %v2085, %v2085
          %2088 = vadd.xlane.f32.xlu0 %v2086
          %v2089 = vpop.xlane.xlu0 %2088
          %2090 = vadd.xlane.f32.xlu0 %v2087
          %v2091 = vpop.xlane.xlu0 %2090
          %v2092 = vmul.f32 %v2089, 0.03125
          %v2093 = vmul.f32 %v2091, 0.03125
          %v2094 = vadd.f32 %v2092, 1e-05
          %v2095 = vadd.f32 %v2093, 1e-05
          %v2096 = vrsqrt.pop %v2094
          %v2097 = vrsqrt.pop %v2095
          %v2098 = vmul.f32 %v2084, %v2096
          %v2099 = vmul.f32 %v2085, %v2097
          %v2101 = vlaneseq
          %v2102 = vshrl.u32 %v2101, 7
          %v2103 = vsub.s32 0, %v2102
          %v2104 = vrot.slane %v2074, %v2103
          %v2106 = vmul.f32 %v2098, %v2104
          %v2107 = vmul.f32 %v2099, %v2104
          %v2109 = vlaneseq
          %v2110 = vshrl.u32 %v2109, 7
          %v2111 = vsub.s32 0, %v2110
          %v2112 = vrot.slane %v2075, %v2111
          %v2114 = vadd.f32 %v2106, %v2112
          %v2115 = vadd.f32 %v2107, %v2112
          %v2116 = vpack.c.bf16 %v2115, %v2114
          %v2118 = vunpack.c.l.b16 %v2116
          %v2119 = vunpack.c.h.b16 %v2116
          %v2120 = vpack.c.b16 %v2118, %v2118
          %v2121 = vpack.c.b16 %v2119, %v2119
          %2124 = vst [vmem:[#allocation6] sm:$0xf] %v2120
          %2125 = vst [vmem:[#allocation6 + $0x4] sm:$0xf] %v2121
        $region88: #{tpu_custom_call.1} parent=75 // pred_fallthru
          _
        // Predicated region
        $region89: #{tpu_custom_call.1} parent=75 // pred_check
          %p2126 = pneg %p391
        $region90: #{tpu_custom_call.1} parent=75 // pred_check_branch
          %2128 = sbr.rel (%p2126) target = $region92
        $region91: #{tpu_custom_call.1} parent=75 // pred_region
          %s2130 = ssub.s32 128, 128
          %2131 = vsyncadd [#allocation5], %s2130
          %s2132 = sshll.u32 [#allocation6], 4
          %s2133 = int_to_ptr.vmem [resolvable:$true] %s2132
          %2138 = dma.vmem_to_hbm [thread:$0]  %s2133, 128, %s14, [#allocation5], 64, 64, 4
        $region92: #{tpu_custom_call.1} parent=75 // pred_fallthru
          _
        // Predicated region
        $region93: #{tpu_custom_call.1} parent=75 // pred_check
          %p2139 = pneg %p391
        $region94: #{tpu_custom_call.1} parent=75 // pred_check_branch
          %2141 = sbr.rel (%p2139) target = $region96
        $region95: #{tpu_custom_call.1} parent=75 // pred_region
          %2142 = dma.done [#allocation5], 128
        $region96: #{tpu_custom_call.1} parent=75 // pred_fallthru
          _
      $region76: #{tpu_custom_call.1} parent=5 // pred_fallthru
        _
      %p2143 = scmp.le.s32.totalorder 2, %s24
      // Predicated region
      $region97: #{tpu_custom_call.1} parent=5 // pred_check
        %p2144 = pneg %p2143
      $region98: #{tpu_custom_call.1} parent=5 // pred_check_branch
        %2146 = sbr.rel (%p2144) target = $region100
      $region99: #{tpu_custom_call.1} parent=5 // pred_region
        %s2147 = ssub.s32 %s24, 2
      $region100: #{tpu_custom_call.1} parent=5 // pred_fallthru
        _
    $region6: #{tpu_custom_call.1} parent=1 // loop_footer
      %s28 = sadd.s32 1, %s24
    $region7: #{tpu_custom_call.1} parent=1 // loop_footer_branch
      %23 = sbr.rel target = $region3
    $region8: #{tpu_custom_call.1} parent=1 // loop_exit
      _
    %2148 = vsyncpa [#allocation4], 1
    %s2149 = scalar_lea.sflag [#allocation4], 1
    %2150 = vsyncpa %s2149, 1
    %2151 = vsyncpa [#allocation5], 1
    %s2152 = scalar_lea.sflag [#allocation5], 1
    %2153 = vsyncpa %s2152, 1

</llo_original>
